<compile_context>
chip_gen: v7x
topology: tpu7x:2x2x1
jax: 0.10.0
libtpu: 0.0.40
codegen_flags: <defaults>
</compile_context>

<pallas_src>
import functools

import jax
import jax.numpy as jnp
from jax import lax
from jax.experimental import pallas as pl
from jax.experimental.pallas import tpu as pltpu


def _apply_act(x, activation):
    if activation == "relu":
        return jnp.maximum(x, 0.0)
    elif activation == "silu":
        return x * jax.nn.sigmoid(x)
    elif activation == "softplus":
        return jax.nn.softplus(x)
    else:
        raise NotImplementedError(activation)


# ---------------------------------------------------------------------------
# Fused Pallas kernel: all GNN layers + all MLP layers in one invocation.
# ---------------------------------------------------------------------------

def _gnn_fused_kernel(*refs, num_gnn_layers, num_mlp_layers, heads, head_dim,
                      activation):
    x_ref, adj_ref = refs[0], refs[1]
    o_ref = refs[-1]
    p_refs = refs[2:-1]          # per GNN layer: (w_all bf16, b_all f32); per MLP: (w bf16, b f32)

    x = x_ref[...]                                   # f32 [N, F]
    maskf = adj_ref[...].astype(jnp.float32)         # int8 -> f32 once; [N_dst, N_src]
    is_edge = maskf > 0.0
    neg = jnp.finfo(jnp.float32).min
    hd = heads * head_dim
    scale = jnp.float32(1.0 / (float(head_dim) ** 0.5))

    idx = 0
    # ---- TransformerConv layers (static unroll; weights differ per layer) ----
    for _ in range(num_gnn_layers):
        w_all = p_refs[idx][...]                     # bf16 [F_in, 4*H*D]  (q|k|v|skip fused)
        b_all = p_refs[idx + 1][...]                 # f32  [1,    4*H*D]
        idx += 2

        # One fused, lane-dense MXU pass for q / k / v / skip (bf16 operands, f32 acc).
        proj = jnp.dot(x.astype(jnp.bfloat16), w_all,
                       preferred_element_type=jnp.float32) + b_all
        q = proj[:, 0 * hd:1 * hd]
        k = proj[:, 1 * hd:2 * hd]
        v = proj[:, 2 * hd:3 * hd]
        skip = proj[:, 3 * hd:4 * hd]

        head_outs = []
        for h in range(heads):                        # small static unroll over heads
            sl = slice(h * head_dim, (h + 1) * head_dim)
            qh = q[:, sl].astype(jnp.bfloat16)
            kh = k[:, sl].astype(jnp.bfloat16)
            vh = v[:, sl].astype(jnp.bfloat16)

            # q_h @ k_h^T without materializing a transpose (contract last dims).
            scores = lax.dot_general(
                qh, kh, (((1,), (1,)), ((), ())),
                preferred_element_type=jnp.float32) * scale
            scores = jnp.where(is_edge, scores, neg)

            m = jnp.max(scores, axis=-1, keepdims=True)       # [N, 1]
            e = jnp.exp(scores - m) * maskf                   # unnormalized weights
            denom = jnp.sum(e, axis=-1, keepdims=True)        # [N, 1]

            # Value matmul first, then normalize with an EUP reciprocal on [N,1]
            # (isolated nodes: e == 0 everywhere -> output row is 0).
            oh = jnp.dot(e.astype(jnp.bfloat16), vh,
                         preferred_element_type=jnp.float32)  # [N, D]
            inv = pl.reciprocal(jnp.where(denom > 0.0, denom, 1.0), approx=True)
            head_outs.append(oh * inv)

        x = _apply_act(jnp.concatenate(head_outs, axis=-1) + skip, activation)

    # ---- MLP layers ----
    for _ in range(num_mlp_layers):
        w = p_refs[idx][...]                          # bf16 [F_in, F_out]
        b = p_refs[idx + 1][...]                      # f32  [1,    F_out]
        idx += 2
        x = _apply_act(jnp.dot(x.astype(jnp.bfloat16), w,
                               preferred_element_type=jnp.float32) + b, activation)

    # Only the final activation ever touches HBM.
    o_ref[...] = x.astype(o_ref.dtype)


# ---------------------------------------------------------------------------
# Wrapper: packs / fuses weights and issues a single pallas_call.
# ---------------------------------------------------------------------------

_VMEM_SPEC = pl.BlockSpec(memory_space=pltpu.MemorySpace.VMEM)


def _pack_params(params):
    """Fuse per-layer projection weights and cast matmul operands to bf16."""
    flat = []
    for layer in params["gnn"]:
        w_all = jnp.concatenate(
            [layer["wq"], layer["wk"], layer["wv"], layer["ws"]],
            axis=1).astype(jnp.bfloat16)                       # [F_in, 4*H*D]
        b_all = jnp.concatenate(
            [layer["bq"], layer["bk"], layer["bv"], layer["bs"]],
            axis=1).astype(jnp.float32)                        # [1, 4*H*D]
        flat += [w_all, b_all]
    for layer in params["mlp"]:
        flat += [layer["w"].astype(jnp.bfloat16), layer["b"].astype(jnp.float32)]
    return flat


def gnn_forward(x, adj, params, *, num_heads, activation="relu"):
    n = x.shape[0]
    num_gnn = len(params["gnn"])
    num_mlp = len(params["mlp"])

    if num_gnn:
        hd = params["gnn"][-1]["wq"].shape[1]
        head_dim = hd // num_heads
    else:
        hd, head_dim = x.shape[1], 1
    out_dim = params["mlp"][-1]["w"].shape[1] if num_mlp else hd

    flat = _pack_params(params)
    args = (x.astype(jnp.float32), adj.astype(jnp.int8), *flat)

    kernel = functools.partial(
        _gnn_fused_kernel,
        num_gnn_layers=num_gnn, num_mlp_layers=num_mlp,
        heads=num_heads, head_dim=head_dim, activation=activation)

    return pl.pallas_call(
        kernel,
        out_shape=jax.ShapeDtypeStruct((n, out_dim), jnp.float32),
        in_specs=[_VMEM_SPEC] * len(args),
        out_specs=_VMEM_SPEC,
        compiler_params=pltpu.CompilerParams(
            vmem_limit_bytes=32 * 1024 * 1024),
    )(*args)


# ---------------------------------------------------------------------------
# Deterministic parameter construction (mirrors GNN.__init__ shapes)
# ---------------------------------------------------------------------------

def init_gnn_params(key, input_dim, hidden_dim, num_gnn_layers, num_heads,
                    num_mlp_layers):
    params = {"gnn": [], "mlp": []}
    last_dim = input_dim
    out_dim = hidden_dim // num_heads
    for _ in range(num_gnn_layers):
        hd = out_dim * num_heads
        layer = {}
        for name in ("wq", "wk", "wv", "ws"):
            key, sub = jax.random.split(key)
            layer[name] = (jax.random.normal(sub, (last_dim, hd), jnp.float32)
                           / jnp.sqrt(jnp.float32(last_dim)))
        for name in ("bq", "bk", "bv", "bs"):
            key, sub = jax.random.split(key)
            layer[name] = 0.01 * jax.random.normal(sub, (1, hd), jnp.float32)
        params["gnn"].append(layer)
        last_dim = hd
        out_dim = hidden_dim // num_heads
    for _ in range(num_mlp_layers):
        key, sub = jax.random.split(key)
        w = (jax.random.normal(sub, (last_dim, hidden_dim), jnp.float32)
             / jnp.sqrt(jnp.float32(last_dim)))
        key, sub = jax.random.split(key)
        b = 0.01 * jax.random.normal(sub, (1, hidden_dim), jnp.float32)
        params["mlp"].append({"w": w, "b": b})
        last_dim = hidden_dim
    return params


# ---------------------------------------------------------------------------

if __name__ == "__main__":
    # Small, forward-consistent shapes
    N = 16            # number of graph nodes
    INPUT_DIM = 32
    HIDDEN_DIM = 32
    NUM_GNN_LAYERS = 2
    NUM_HEADS = 4
    NUM_MLP_LAYERS = 2
    ACTIVATION = "relu"

    key = jax.random.PRNGKey(0)
    key, kx, kadj, kp = jax.random.split(key, 4)

    x = jax.random.normal(kx, (N, INPUT_DIM), jnp.float32)
    # random binary adjacency with self-loops, shipped as int8
    adj = (jax.random.uniform(kadj, (N, N)) < 0.3)
    adj = jnp.logical_or(adj, jnp.eye(N, dtype=jnp.bool_)).astype(jnp.int8)

    params = init_gnn_params(kp, INPUT_DIM, HIDDEN_DIM, NUM_GNN_LAYERS,
                             NUM_HEADS, NUM_MLP_LAYERS)

    out = gnn_forward(x, adj, params, num_heads=NUM_HEADS, activation=ACTIVATION)
    out = jax.block_until_ready(out)

    assert out.shape == (N, HIDDEN_DIM), out.shape
    assert bool(jnp.all(jnp.isfinite(out)))
    print("KERNEL_OK")
</pallas_src>

<mosaic_0001>
module attributes {stable_mosaic.version = 11 : i64} {
  func.func @_gnn_fused_kernel(%arg0: memref<16x32xf32, #tpu.memory_space<vmem>>, %arg1: memref<16x16xi8, #tpu.memory_space<vmem>>, %arg2: memref<32x128xbf16, #tpu.memory_space<vmem>>, %arg3: memref<1x128xf32, #tpu.memory_space<vmem>>, %arg4: memref<32x128xbf16, #tpu.memory_space<vmem>>, %arg5: memref<1x128xf32, #tpu.memory_space<vmem>>, %arg6: memref<32x32xbf16, #tpu.memory_space<vmem>>, %arg7: memref<1x32xf32, #tpu.memory_space<vmem>>, %arg8: memref<32x32xbf16, #tpu.memory_space<vmem>>, %arg9: memref<1x32xf32, #tpu.memory_space<vmem>>, %arg10: memref<16x32xf32, #tpu.memory_space<vmem>>) attributes {dimension_semantics = [], scalar_prefetch = 0 : i64, scratch_operands = 0 : i64, tpu.core_type = #tpu.core_type<tc>} {
    %c0 = arith.constant 0 : index
    %c0_0 = arith.constant 0 : index
    %0 = vector.load %arg0[%c0, %c0_0] : memref<16x32xf32, #tpu.memory_space<vmem>>, vector<16x32xf32>
    %c0_1 = arith.constant 0 : index
    %c0_2 = arith.constant 0 : index
    %1 = vector.load %arg1[%c0_1, %c0_2] : memref<16x16xi8, #tpu.memory_space<vmem>>, vector<16x16xi8>
    %2 = arith.sitofp %1 : vector<16x16xi8> to vector<16x16xf32>
    %cst = arith.constant 0.000000e+00 : f32
    %3 = vector.broadcast %cst : f32 to vector<16x16xf32>
    %4 = arith.cmpf ogt, %2, %3 : vector<16x16xf32>
    %c0_3 = arith.constant 0 : index
    %c0_4 = arith.constant 0 : index
    %5 = vector.load %arg2[%c0_3, %c0_4] : memref<32x128xbf16, #tpu.memory_space<vmem>>, vector<32x128xbf16>
    %c0_5 = arith.constant 0 : index
    %c0_6 = arith.constant 0 : index
    %6 = vector.load %arg3[%c0_5, %c0_6] : memref<1x128xf32, #tpu.memory_space<vmem>>, vector<1x128xf32>
    %7 = arith.truncf %0 : vector<16x32xf32> to vector<16x32xbf16>
    %cst_7 = arith.constant dense<0.000000e+00> : vector<16x128xf32>
    %8 = tpu.matmul %7, %5, %cst_7 {dimension_numbers = #tpu.dot_dimension_numbers<[1], [0], [0], [1], [0, 0, 1, 1], [], []>} : vector<16x32xbf16>, vector<32x128xbf16>, vector<16x128xf32> -> vector<16x128xf32>
    %9 = vector.broadcast %6 : vector<1x128xf32> to vector<16x128xf32>
    %10 = arith.addf %8, %9 : vector<16x128xf32>
    %11 = vector.extract_strided_slice %10 {offsets = [0, 0], sizes = [16, 32], strides = [1, 1]} : vector<16x128xf32> to vector<16x32xf32>
    %12 = vector.extract_strided_slice %10 {offsets = [0, 32], sizes = [16, 32], strides = [1, 1]} : vector<16x128xf32> to vector<16x32xf32>
    %13 = vector.extract_strided_slice %10 {offsets = [0, 64], sizes = [16, 32], strides = [1, 1]} : vector<16x128xf32> to vector<16x32xf32>
    %14 = vector.extract_strided_slice %10 {offsets = [0, 96], sizes = [16, 32], strides = [1, 1]} : vector<16x128xf32> to vector<16x32xf32>
    %15 = vector.extract_strided_slice %11 {offsets = [0, 0], sizes = [16, 8], strides = [1, 1]} : vector<16x32xf32> to vector<16x8xf32>
    %16 = arith.truncf %15 : vector<16x8xf32> to vector<16x8xbf16>
    %17 = vector.extract_strided_slice %12 {offsets = [0, 0], sizes = [16, 8], strides = [1, 1]} : vector<16x32xf32> to vector<16x8xf32>
    %18 = arith.truncf %17 : vector<16x8xf32> to vector<16x8xbf16>
    %19 = vector.extract_strided_slice %13 {offsets = [0, 0], sizes = [16, 8], strides = [1, 1]} : vector<16x32xf32> to vector<16x8xf32>
    %20 = arith.truncf %19 : vector<16x8xf32> to vector<16x8xbf16>
    %cst_8 = arith.constant dense<0.000000e+00> : vector<16x16xf32>
    %21 = tpu.matmul %16, %18, %cst_8 {dimension_numbers = #tpu.dot_dimension_numbers<[1], [1], [0], [0], [0, 0, 1, 0], [], []>} : vector<16x8xbf16>, vector<16x8xbf16>, vector<16x16xf32> -> vector<16x16xf32>
    %cst_9 = arith.constant 0.353553385 : f32
    %22 = vector.broadcast %cst_9 : f32 to vector<16x16xf32>
    %23 = arith.mulf %21, %22 : vector<16x16xf32>
    %cst_10 = arith.constant -3.40282347E+38 : f32
    %24 = vector.broadcast %cst_10 : f32 to vector<16x16xf32>
    %25 = arith.select %4, %23, %24 : vector<16x16xi1>, vector<16x16xf32>
    %cst_11 = arith.constant dense<0xFF800000> : vector<16xf32>
    %26 = vector.multi_reduction <maximumf>, %25, %cst_11 [1] : vector<16x16xf32> to vector<16xf32>
    %27 = vector.shape_cast %26 : vector<16xf32> to vector<16x1xf32>
    %28 = vector.broadcast %27 : vector<16x1xf32> to vector<16x16xf32>
    %29 = arith.subf %25, %28 : vector<16x16xf32>
    %30 = math.exp %29 : vector<16x16xf32>
    %31 = arith.mulf %30, %2 : vector<16x16xf32>
    %cst_12 = arith.constant dense<0.000000e+00> : vector<16xf32>
    %32 = vector.multi_reduction <add>, %31, %cst_12 [1] : vector<16x16xf32> to vector<16xf32>
    %33 = vector.shape_cast %32 : vector<16xf32> to vector<16x1xf32>
    %34 = arith.truncf %31 : vector<16x16xf32> to vector<16x16xbf16>
    %cst_13 = arith.constant dense<0.000000e+00> : vector<16x8xf32>
    %35 = tpu.matmul %34, %20, %cst_13 {dimension_numbers = #tpu.dot_dimension_numbers<[1], [0], [0], [1], [0, 0, 1, 1], [], []>} : vector<16x16xbf16>, vector<16x8xbf16>, vector<16x8xf32> -> vector<16x8xf32>
    %cst_14 = arith.constant 0.000000e+00 : f32
    %36 = vector.broadcast %cst_14 : f32 to vector<16x1xf32>
    %37 = arith.cmpf ogt, %33, %36 : vector<16x1xf32>
    %cst_15 = arith.constant 1.000000e+00 : f32
    %38 = vector.broadcast %cst_15 : f32 to vector<16x1xf32>
    %39 = arith.select %37, %33, %38 : vector<16x1xi1>, vector<16x1xf32>
    %40 = tpu.reciprocal %39 {approx = true} : vector<16x1xf32> -> vector<16x1xf32>
    %41 = vector.broadcast %40 : vector<16x1xf32> to vector<16x8xf32>
    %42 = arith.mulf %35, %41 : vector<16x8xf32>
    %43 = vector.extract_strided_slice %11 {offsets = [0, 8], sizes = [16, 8], strides = [1, 1]} : vector<16x32xf32> to vector<16x8xf32>
    %44 = arith.truncf %43 : vector<16x8xf32> to vector<16x8xbf16>
    %45 = vector.extract_strided_slice %12 {offsets = [0, 8], sizes = [16, 8], strides = [1, 1]} : vector<16x32xf32> to vector<16x8xf32>
    %46 = arith.truncf %45 : vector<16x8xf32> to vector<16x8xbf16>
    %47 = vector.extract_strided_slice %13 {offsets = [0, 8], sizes = [16, 8], strides = [1, 1]} : vector<16x32xf32> to vector<16x8xf32>
    %48 = arith.truncf %47 : vector<16x8xf32> to vector<16x8xbf16>
    %cst_16 = arith.constant dense<0.000000e+00> : vector<16x16xf32>
    %49 = tpu.matmul %44, %46, %cst_16 {dimension_numbers = #tpu.dot_dimension_numbers<[1], [1], [0], [0], [0, 0, 1, 0], [], []>} : vector<16x8xbf16>, vector<16x8xbf16>, vector<16x16xf32> -> vector<16x16xf32>
    %cst_17 = arith.constant 0.353553385 : f32
    %50 = vector.broadcast %cst_17 : f32 to vector<16x16xf32>
    %51 = arith.mulf %49, %50 : vector<16x16xf32>
    %cst_18 = arith.constant -3.40282347E+38 : f32
    %52 = vector.broadcast %cst_18 : f32 to vector<16x16xf32>
    %53 = arith.select %4, %51, %52 : vector<16x16xi1>, vector<16x16xf32>
    %cst_19 = arith.constant dense<0xFF800000> : vector<16xf32>
    %54 = vector.multi_reduction <maximumf>, %53, %cst_19 [1] : vector<16x16xf32> to vector<16xf32>
    %55 = vector.shape_cast %54 : vector<16xf32> to vector<16x1xf32>
    %56 = vector.broadcast %55 : vector<16x1xf32> to vector<16x16xf32>
    %57 = arith.subf %53, %56 : vector<16x16xf32>
    %58 = math.exp %57 : vector<16x16xf32>
    %59 = arith.mulf %58, %2 : vector<16x16xf32>
    %cst_20 = arith.constant dense<0.000000e+00> : vector<16xf32>
    %60 = vector.multi_reduction <add>, %59, %cst_20 [1] : vector<16x16xf32> to vector<16xf32>
    %61 = vector.shape_cast %60 : vector<16xf32> to vector<16x1xf32>
    %62 = arith.truncf %59 : vector<16x16xf32> to vector<16x16xbf16>
    %cst_21 = arith.constant dense<0.000000e+00> : vector<16x8xf32>
    %63 = tpu.matmul %62, %48, %cst_21 {dimension_numbers = #tpu.dot_dimension_numbers<[1], [0], [0], [1], [0, 0, 1, 1], [], []>} : vector<16x16xbf16>, vector<16x8xbf16>, vector<16x8xf32> -> vector<16x8xf32>
    %cst_22 = arith.constant 0.000000e+00 : f32
    %64 = vector.broadcast %cst_22 : f32 to vector<16x1xf32>
    %65 = arith.cmpf ogt, %61, %64 : vector<16x1xf32>
    %cst_23 = arith.constant 1.000000e+00 : f32
    %66 = vector.broadcast %cst_23 : f32 to vector<16x1xf32>
    %67 = arith.select %65, %61, %66 : vector<16x1xi1>, vector<16x1xf32>
    %68 = tpu.reciprocal %67 {approx = true} : vector<16x1xf32> -> vector<16x1xf32>
    %69 = vector.broadcast %68 : vector<16x1xf32> to vector<16x8xf32>
    %70 = arith.mulf %63, %69 : vector<16x8xf32>
    %71 = vector.extract_strided_slice %11 {offsets = [0, 16], sizes = [16, 8], strides = [1, 1]} : vector<16x32xf32> to vector<16x8xf32>
    %72 = arith.truncf %71 : vector<16x8xf32> to vector<16x8xbf16>
    %73 = vector.extract_strided_slice %12 {offsets = [0, 16], sizes = [16, 8], strides = [1, 1]} : vector<16x32xf32> to vector<16x8xf32>
    %74 = arith.truncf %73 : vector<16x8xf32> to vector<16x8xbf16>
    %75 = vector.extract_strided_slice %13 {offsets = [0, 16], sizes = [16, 8], strides = [1, 1]} : vector<16x32xf32> to vector<16x8xf32>
    %76 = arith.truncf %75 : vector<16x8xf32> to vector<16x8xbf16>
    %cst_24 = arith.constant dense<0.000000e+00> : vector<16x16xf32>
    %77 = tpu.matmul %72, %74, %cst_24 {dimension_numbers = #tpu.dot_dimension_numbers<[1], [1], [0], [0], [0, 0, 1, 0], [], []>} : vector<16x8xbf16>, vector<16x8xbf16>, vector<16x16xf32> -> vector<16x16xf32>
    %cst_25 = arith.constant 0.353553385 : f32
    %78 = vector.broadcast %cst_25 : f32 to vector<16x16xf32>
    %79 = arith.mulf %77, %78 : vector<16x16xf32>
    %cst_26 = arith.constant -3.40282347E+38 : f32
    %80 = vector.broadcast %cst_26 : f32 to vector<16x16xf32>
    %81 = arith.select %4, %79, %80 : vector<16x16xi1>, vector<16x16xf32>
    %cst_27 = arith.constant dense<0xFF800000> : vector<16xf32>
    %82 = vector.multi_reduction <maximumf>, %81, %cst_27 [1] : vector<16x16xf32> to vector<16xf32>
    %83 = vector.shape_cast %82 : vector<16xf32> to vector<16x1xf32>
    %84 = vector.broadcast %83 : vector<16x1xf32> to vector<16x16xf32>
    %85 = arith.subf %81, %84 : vector<16x16xf32>
    %86 = math.exp %85 : vector<16x16xf32>
    %87 = arith.mulf %86, %2 : vector<16x16xf32>
    %cst_28 = arith.constant dense<0.000000e+00> : vector<16xf32>
    %88 = vector.multi_reduction <add>, %87, %cst_28 [1] : vector<16x16xf32> to vector<16xf32>
    %89 = vector.shape_cast %88 : vector<16xf32> to vector<16x1xf32>
    %90 = arith.truncf %87 : vector<16x16xf32> to vector<16x16xbf16>
    %cst_29 = arith.constant dense<0.000000e+00> : vector<16x8xf32>
    %91 = tpu.matmul %90, %76, %cst_29 {dimension_numbers = #tpu.dot_dimension_numbers<[1], [0], [0], [1], [0, 0, 1, 1], [], []>} : vector<16x16xbf16>, vector<16x8xbf16>, vector<16x8xf32> -> vector<16x8xf32>
    %cst_30 = arith.constant 0.000000e+00 : f32
    %92 = vector.broadcast %cst_30 : f32 to vector<16x1xf32>
    %93 = arith.cmpf ogt, %89, %92 : vector<16x1xf32>
    %cst_31 = arith.constant 1.000000e+00 : f32
    %94 = vector.broadcast %cst_31 : f32 to vector<16x1xf32>
    %95 = arith.select %93, %89, %94 : vector<16x1xi1>, vector<16x1xf32>
    %96 = tpu.reciprocal %95 {approx = true} : vector<16x1xf32> -> vector<16x1xf32>
    %97 = vector.broadcast %96 : vector<16x1xf32> to vector<16x8xf32>
    %98 = arith.mulf %91, %97 : vector<16x8xf32>
    %99 = vector.extract_strided_slice %11 {offsets = [0, 24], sizes = [16, 8], strides = [1, 1]} : vector<16x32xf32> to vector<16x8xf32>
    %100 = arith.truncf %99 : vector<16x8xf32> to vector<16x8xbf16>
    %101 = vector.extract_strided_slice %12 {offsets = [0, 24], sizes = [16, 8], strides = [1, 1]} : vector<16x32xf32> to vector<16x8xf32>
    %102 = arith.truncf %101 : vector<16x8xf32> to vector<16x8xbf16>
    %103 = vector.extract_strided_slice %13 {offsets = [0, 24], sizes = [16, 8], strides = [1, 1]} : vector<16x32xf32> to vector<16x8xf32>
    %104 = arith.truncf %103 : vector<16x8xf32> to vector<16x8xbf16>
    %cst_32 = arith.constant dense<0.000000e+00> : vector<16x16xf32>
    %105 = tpu.matmul %100, %102, %cst_32 {dimension_numbers = #tpu.dot_dimension_numbers<[1], [1], [0], [0], [0, 0, 1, 0], [], []>} : vector<16x8xbf16>, vector<16x8xbf16>, vector<16x16xf32> -> vector<16x16xf32>
    %cst_33 = arith.constant 0.353553385 : f32
    %106 = vector.broadcast %cst_33 : f32 to vector<16x16xf32>
    %107 = arith.mulf %105, %106 : vector<16x16xf32>
    %cst_34 = arith.constant -3.40282347E+38 : f32
    %108 = vector.broadcast %cst_34 : f32 to vector<16x16xf32>
    %109 = arith.select %4, %107, %108 : vector<16x16xi1>, vector<16x16xf32>
    %cst_35 = arith.constant dense<0xFF800000> : vector<16xf32>
    %110 = vector.multi_reduction <maximumf>, %109, %cst_35 [1] : vector<16x16xf32> to vector<16xf32>
    %111 = vector.shape_cast %110 : vector<16xf32> to vector<16x1xf32>
    %112 = vector.broadcast %111 : vector<16x1xf32> to vector<16x16xf32>
    %113 = arith.subf %109, %112 : vector<16x16xf32>
    %114 = math.exp %113 : vector<16x16xf32>
    %115 = arith.mulf %114, %2 : vector<16x16xf32>
    %cst_36 = arith.constant dense<0.000000e+00> : vector<16xf32>
    %116 = vector.multi_reduction <add>, %115, %cst_36 [1] : vector<16x16xf32> to vector<16xf32>
    %117 = vector.shape_cast %116 : vector<16xf32> to vector<16x1xf32>
    %118 = arith.truncf %115 : vector<16x16xf32> to vector<16x16xbf16>
    %cst_37 = arith.constant dense<0.000000e+00> : vector<16x8xf32>
    %119 = tpu.matmul %118, %104, %cst_37 {dimension_numbers = #tpu.dot_dimension_numbers<[1], [0], [0], [1], [0, 0, 1, 1], [], []>} : vector<16x16xbf16>, vector<16x8xbf16>, vector<16x8xf32> -> vector<16x8xf32>
    %cst_38 = arith.constant 0.000000e+00 : f32
    %120 = vector.broadcast %cst_38 : f32 to vector<16x1xf32>
    %121 = arith.cmpf ogt, %117, %120 : vector<16x1xf32>
    %cst_39 = arith.constant 1.000000e+00 : f32
    %122 = vector.broadcast %cst_39 : f32 to vector<16x1xf32>
    %123 = arith.select %121, %117, %122 : vector<16x1xi1>, vector<16x1xf32>
    %124 = tpu.reciprocal %123 {approx = true} : vector<16x1xf32> -> vector<16x1xf32>
    %125 = vector.broadcast %124 : vector<16x1xf32> to vector<16x8xf32>
    %126 = arith.mulf %119, %125 : vector<16x8xf32>
    %127 = tpu.concatenate %42, %70, %98, %126 in 1 : vector<16x8xf32>, vector<16x8xf32>, vector<16x8xf32>, vector<16x8xf32> -> vector<16x32xf32>
    %128 = arith.addf %127, %14 : vector<16x32xf32>
    %cst_40 = arith.constant 0.000000e+00 : f32
    %129 = vector.broadcast %cst_40 : f32 to vector<16x32xf32>
    %130 = arith.maximumf %128, %129 : vector<16x32xf32>
    %c0_41 = arith.constant 0 : index
    %c0_42 = arith.constant 0 : index
    %131 = vector.load %arg4[%c0_41, %c0_42] : memref<32x128xbf16, #tpu.memory_space<vmem>>, vector<32x128xbf16>
    %c0_43 = arith.constant 0 : index
    %c0_44 = arith.constant 0 : index
    %132 = vector.load %arg5[%c0_43, %c0_44] : memref<1x128xf32, #tpu.memory_space<vmem>>, vector<1x128xf32>
    %133 = arith.truncf %130 : vector<16x32xf32> to vector<16x32xbf16>
    %cst_45 = arith.constant dense<0.000000e+00> : vector<16x128xf32>
    %134 = tpu.matmul %133, %131, %cst_45 {dimension_numbers = #tpu.dot_dimension_numbers<[1], [0], [0], [1], [0, 0, 1, 1], [], []>} : vector<16x32xbf16>, vector<32x128xbf16>, vector<16x128xf32> -> vector<16x128xf32>
    %135 = vector.broadcast %132 : vector<1x128xf32> to vector<16x128xf32>
    %136 = arith.addf %134, %135 : vector<16x128xf32>
    %137 = vector.extract_strided_slice %136 {offsets = [0, 0], sizes = [16, 32], strides = [1, 1]} : vector<16x128xf32> to vector<16x32xf32>
    %138 = vector.extract_strided_slice %136 {offsets = [0, 32], sizes = [16, 32], strides = [1, 1]} : vector<16x128xf32> to vector<16x32xf32>
    %139 = vector.extract_strided_slice %136 {offsets = [0, 64], sizes = [16, 32], strides = [1, 1]} : vector<16x128xf32> to vector<16x32xf32>
    %140 = vector.extract_strided_slice %136 {offsets = [0, 96], sizes = [16, 32], strides = [1, 1]} : vector<16x128xf32> to vector<16x32xf32>
    %141 = vector.extract_strided_slice %137 {offsets = [0, 0], sizes = [16, 8], strides = [1, 1]} : vector<16x32xf32> to vector<16x8xf32>
    %142 = arith.truncf %141 : vector<16x8xf32> to vector<16x8xbf16>
    %143 = vector.extract_strided_slice %138 {offsets = [0, 0], sizes = [16, 8], strides = [1, 1]} : vector<16x32xf32> to vector<16x8xf32>
    %144 = arith.truncf %143 : vector<16x8xf32> to vector<16x8xbf16>
    %145 = vector.extract_strided_slice %139 {offsets = [0, 0], sizes = [16, 8], strides = [1, 1]} : vector<16x32xf32> to vector<16x8xf32>
    %146 = arith.truncf %145 : vector<16x8xf32> to vector<16x8xbf16>
    %cst_46 = arith.constant dense<0.000000e+00> : vector<16x16xf32>
    %147 = tpu.matmul %142, %144, %cst_46 {dimension_numbers = #tpu.dot_dimension_numbers<[1], [1], [0], [0], [0, 0, 1, 0], [], []>} : vector<16x8xbf16>, vector<16x8xbf16>, vector<16x16xf32> -> vector<16x16xf32>
    %cst_47 = arith.constant 0.353553385 : f32
    %148 = vector.broadcast %cst_47 : f32 to vector<16x16xf32>
    %149 = arith.mulf %147, %148 : vector<16x16xf32>
    %cst_48 = arith.constant -3.40282347E+38 : f32
    %150 = vector.broadcast %cst_48 : f32 to vector<16x16xf32>
    %151 = arith.select %4, %149, %150 : vector<16x16xi1>, vector<16x16xf32>
    %cst_49 = arith.constant dense<0xFF800000> : vector<16xf32>
    %152 = vector.multi_reduction <maximumf>, %151, %cst_49 [1] : vector<16x16xf32> to vector<16xf32>
    %153 = vector.shape_cast %152 : vector<16xf32> to vector<16x1xf32>
    %154 = vector.broadcast %153 : vector<16x1xf32> to vector<16x16xf32>
    %155 = arith.subf %151, %154 : vector<16x16xf32>
    %156 = math.exp %155 : vector<16x16xf32>
    %157 = arith.mulf %156, %2 : vector<16x16xf32>
    %cst_50 = arith.constant dense<0.000000e+00> : vector<16xf32>
    %158 = vector.multi_reduction <add>, %157, %cst_50 [1] : vector<16x16xf32> to vector<16xf32>
    %159 = vector.shape_cast %158 : vector<16xf32> to vector<16x1xf32>
    %160 = arith.truncf %157 : vector<16x16xf32> to vector<16x16xbf16>
    %cst_51 = arith.constant dense<0.000000e+00> : vector<16x8xf32>
    %161 = tpu.matmul %160, %146, %cst_51 {dimension_numbers = #tpu.dot_dimension_numbers<[1], [0], [0], [1], [0, 0, 1, 1], [], []>} : vector<16x16xbf16>, vector<16x8xbf16>, vector<16x8xf32> -> vector<16x8xf32>
    %cst_52 = arith.constant 0.000000e+00 : f32
    %162 = vector.broadcast %cst_52 : f32 to vector<16x1xf32>
    %163 = arith.cmpf ogt, %159, %162 : vector<16x1xf32>
    %cst_53 = arith.constant 1.000000e+00 : f32
    %164 = vector.broadcast %cst_53 : f32 to vector<16x1xf32>
    %165 = arith.select %163, %159, %164 : vector<16x1xi1>, vector<16x1xf32>
    %166 = tpu.reciprocal %165 {approx = true} : vector<16x1xf32> -> vector<16x1xf32>
    %167 = vector.broadcast %166 : vector<16x1xf32> to vector<16x8xf32>
    %168 = arith.mulf %161, %167 : vector<16x8xf32>
    %169 = vector.extract_strided_slice %137 {offsets = [0, 8], sizes = [16, 8], strides = [1, 1]} : vector<16x32xf32> to vector<16x8xf32>
    %170 = arith.truncf %169 : vector<16x8xf32> to vector<16x8xbf16>
    %171 = vector.extract_strided_slice %138 {offsets = [0, 8], sizes = [16, 8], strides = [1, 1]} : vector<16x32xf32> to vector<16x8xf32>
    %172 = arith.truncf %171 : vector<16x8xf32> to vector<16x8xbf16>
    %173 = vector.extract_strided_slice %139 {offsets = [0, 8], sizes = [16, 8], strides = [1, 1]} : vector<16x32xf32> to vector<16x8xf32>
    %174 = arith.truncf %173 : vector<16x8xf32> to vector<16x8xbf16>
    %cst_54 = arith.constant dense<0.000000e+00> : vector<16x16xf32>
    %175 = tpu.matmul %170, %172, %cst_54 {dimension_numbers = #tpu.dot_dimension_numbers<[1], [1], [0], [0], [0, 0, 1, 0], [], []>} : vector<16x8xbf16>, vector<16x8xbf16>, vector<16x16xf32> -> vector<16x16xf32>
    %cst_55 = arith.constant 0.353553385 : f32
    %176 = vector.broadcast %cst_55 : f32 to vector<16x16xf32>
    %177 = arith.mulf %175, %176 : vector<16x16xf32>
    %cst_56 = arith.constant -3.40282347E+38 : f32
    %178 = vector.broadcast %cst_56 : f32 to vector<16x16xf32>
    %179 = arith.select %4, %177, %178 : vector<16x16xi1>, vector<16x16xf32>
    %cst_57 = arith.constant dense<0xFF800000> : vector<16xf32>
    %180 = vector.multi_reduction <maximumf>, %179, %cst_57 [1] : vector<16x16xf32> to vector<16xf32>
    %181 = vector.shape_cast %180 : vector<16xf32> to vector<16x1xf32>
    %182 = vector.broadcast %181 : vector<16x1xf32> to vector<16x16xf32>
    %183 = arith.subf %179, %182 : vector<16x16xf32>
    %184 = math.exp %183 : vector<16x16xf32>
    %185 = arith.mulf %184, %2 : vector<16x16xf32>
    %cst_58 = arith.constant dense<0.000000e+00> : vector<16xf32>
    %186 = vector.multi_reduction <add>, %185, %cst_58 [1] : vector<16x16xf32> to vector<16xf32>
    %187 = vector.shape_cast %186 : vector<16xf32> to vector<16x1xf32>
    %188 = arith.truncf %185 : vector<16x16xf32> to vector<16x16xbf16>
    %cst_59 = arith.constant dense<0.000000e+00> : vector<16x8xf32>
    %189 = tpu.matmul %188, %174, %cst_59 {dimension_numbers = #tpu.dot_dimension_numbers<[1], [0], [0], [1], [0, 0, 1, 1], [], []>} : vector<16x16xbf16>, vector<16x8xbf16>, vector<16x8xf32> -> vector<16x8xf32>
    %cst_60 = arith.constant 0.000000e+00 : f32
    %190 = vector.broadcast %cst_60 : f32 to vector<16x1xf32>
    %191 = arith.cmpf ogt, %187, %190 : vector<16x1xf32>
    %cst_61 = arith.constant 1.000000e+00 : f32
    %192 = vector.broadcast %cst_61 : f32 to vector<16x1xf32>
    %193 = arith.select %191, %187, %192 : vector<16x1xi1>, vector<16x1xf32>
    %194 = tpu.reciprocal %193 {approx = true} : vector<16x1xf32> -> vector<16x1xf32>
    %195 = vector.broadcast %194 : vector<16x1xf32> to vector<16x8xf32>
    %196 = arith.mulf %189, %195 : vector<16x8xf32>
    %197 = vector.extract_strided_slice %137 {offsets = [0, 16], sizes = [16, 8], strides = [1, 1]} : vector<16x32xf32> to vector<16x8xf32>
    %198 = arith.truncf %197 : vector<16x8xf32> to vector<16x8xbf16>
    %199 = vector.extract_strided_slice %138 {offsets = [0, 16], sizes = [16, 8], strides = [1, 1]} : vector<16x32xf32> to vector<16x8xf32>
    %200 = arith.truncf %199 : vector<16x8xf32> to vector<16x8xbf16>
    %201 = vector.extract_strided_slice %139 {offsets = [0, 16], sizes = [16, 8], strides = [1, 1]} : vector<16x32xf32> to vector<16x8xf32>
    %202 = arith.truncf %201 : vector<16x8xf32> to vector<16x8xbf16>
    %cst_62 = arith.constant dense<0.000000e+00> : vector<16x16xf32>
    %203 = tpu.matmul %198, %200, %cst_62 {dimension_numbers = #tpu.dot_dimension_numbers<[1], [1], [0], [0], [0, 0, 1, 0], [], []>} : vector<16x8xbf16>, vector<16x8xbf16>, vector<16x16xf32> -> vector<16x16xf32>
    %cst_63 = arith.constant 0.353553385 : f32
    %204 = vector.broadcast %cst_63 : f32 to vector<16x16xf32>
    %205 = arith.mulf %203, %204 : vector<16x16xf32>
    %cst_64 = arith.constant -3.40282347E+38 : f32
    %206 = vector.broadcast %cst_64 : f32 to vector<16x16xf32>
    %207 = arith.select %4, %205, %206 : vector<16x16xi1>, vector<16x16xf32>
    %cst_65 = arith.constant dense<0xFF800000> : vector<16xf32>
    %208 = vector.multi_reduction <maximumf>, %207, %cst_65 [1] : vector<16x16xf32> to vector<16xf32>
    %209 = vector.shape_cast %208 : vector<16xf32> to vector<16x1xf32>
    %210 = vector.broadcast %209 : vector<16x1xf32> to vector<16x16xf32>
    %211 = arith.subf %207, %210 : vector<16x16xf32>
    %212 = math.exp %211 : vector<16x16xf32>
    %213 = arith.mulf %212, %2 : vector<16x16xf32>
    %cst_66 = arith.constant dense<0.000000e+00> : vector<16xf32>
    %214 = vector.multi_reduction <add>, %213, %cst_66 [1] : vector<16x16xf32> to vector<16xf32>
    %215 = vector.shape_cast %214 : vector<16xf32> to vector<16x1xf32>
    %216 = arith.truncf %213 : vector<16x16xf32> to vector<16x16xbf16>
    %cst_67 = arith.constant dense<0.000000e+00> : vector<16x8xf32>
    %217 = tpu.matmul %216, %202, %cst_67 {dimension_numbers = #tpu.dot_dimension_numbers<[1], [0], [0], [1], [0, 0, 1, 1], [], []>} : vector<16x16xbf16>, vector<16x8xbf16>, vector<16x8xf32> -> vector<16x8xf32>
    %cst_68 = arith.constant 0.000000e+00 : f32
    %218 = vector.broadcast %cst_68 : f32 to vector<16x1xf32>
    %219 = arith.cmpf ogt, %215, %218 : vector<16x1xf32>
    %cst_69 = arith.constant 1.000000e+00 : f32
    %220 = vector.broadcast %cst_69 : f32 to vector<16x1xf32>
    %221 = arith.select %219, %215, %220 : vector<16x1xi1>, vector<16x1xf32>
    %222 = tpu.reciprocal %221 {approx = true} : vector<16x1xf32> -> vector<16x1xf32>
    %223 = vector.broadcast %222 : vector<16x1xf32> to vector<16x8xf32>
    %224 = arith.mulf %217, %223 : vector<16x8xf32>
    %225 = vector.extract_strided_slice %137 {offsets = [0, 24], sizes = [16, 8], strides = [1, 1]} : vector<16x32xf32> to vector<16x8xf32>
    %226 = arith.truncf %225 : vector<16x8xf32> to vector<16x8xbf16>
    %227 = vector.extract_strided_slice %138 {offsets = [0, 24], sizes = [16, 8], strides = [1, 1]} : vector<16x32xf32> to vector<16x8xf32>
    %228 = arith.truncf %227 : vector<16x8xf32> to vector<16x8xbf16>
    %229 = vector.extract_strided_slice %139 {offsets = [0, 24], sizes = [16, 8], strides = [1, 1]} : vector<16x32xf32> to vector<16x8xf32>
    %230 = arith.truncf %229 : vector<16x8xf32> to vector<16x8xbf16>
    %cst_70 = arith.constant dense<0.000000e+00> : vector<16x16xf32>
    %231 = tpu.matmul %226, %228, %cst_70 {dimension_numbers = #tpu.dot_dimension_numbers<[1], [1], [0], [0], [0, 0, 1, 0], [], []>} : vector<16x8xbf16>, vector<16x8xbf16>, vector<16x16xf32> -> vector<16x16xf32>
    %cst_71 = arith.constant 0.353553385 : f32
    %232 = vector.broadcast %cst_71 : f32 to vector<16x16xf32>
    %233 = arith.mulf %231, %232 : vector<16x16xf32>
    %cst_72 = arith.constant -3.40282347E+38 : f32
    %234 = vector.broadcast %cst_72 : f32 to vector<16x16xf32>
    %235 = arith.select %4, %233, %234 : vector<16x16xi1>, vector<16x16xf32>
    %cst_73 = arith.constant dense<0xFF800000> : vector<16xf32>
    %236 = vector.multi_reduction <maximumf>, %235, %cst_73 [1] : vector<16x16xf32> to vector<16xf32>
    %237 = vector.shape_cast %236 : vector<16xf32> to vector<16x1xf32>
    %238 = vector.broadcast %237 : vector<16x1xf32> to vector<16x16xf32>
    %239 = arith.subf %235, %238 : vector<16x16xf32>
    %240 = math.exp %239 : vector<16x16xf32>
    %241 = arith.mulf %240, %2 : vector<16x16xf32>
    %cst_74 = arith.constant dense<0.000000e+00> : vector<16xf32>
    %242 = vector.multi_reduction <add>, %241, %cst_74 [1] : vector<16x16xf32> to vector<16xf32>
    %243 = vector.shape_cast %242 : vector<16xf32> to vector<16x1xf32>
    %244 = arith.truncf %241 : vector<16x16xf32> to vector<16x16xbf16>
    %cst_75 = arith.constant dense<0.000000e+00> : vector<16x8xf32>
    %245 = tpu.matmul %244, %230, %cst_75 {dimension_numbers = #tpu.dot_dimension_numbers<[1], [0], [0], [1], [0, 0, 1, 1], [], []>} : vector<16x16xbf16>, vector<16x8xbf16>, vector<16x8xf32> -> vector<16x8xf32>
    %cst_76 = arith.constant 0.000000e+00 : f32
    %246 = vector.broadcast %cst_76 : f32 to vector<16x1xf32>
    %247 = arith.cmpf ogt, %243, %246 : vector<16x1xf32>
    %cst_77 = arith.constant 1.000000e+00 : f32
    %248 = vector.broadcast %cst_77 : f32 to vector<16x1xf32>
    %249 = arith.select %247, %243, %248 : vector<16x1xi1>, vector<16x1xf32>
    %250 = tpu.reciprocal %249 {approx = true} : vector<16x1xf32> -> vector<16x1xf32>
    %251 = vector.broadcast %250 : vector<16x1xf32> to vector<16x8xf32>
    %252 = arith.mulf %245, %251 : vector<16x8xf32>
    %253 = tpu.concatenate %168, %196, %224, %252 in 1 : vector<16x8xf32>, vector<16x8xf32>, vector<16x8xf32>, vector<16x8xf32> -> vector<16x32xf32>
    %254 = arith.addf %253, %140 : vector<16x32xf32>
    %cst_78 = arith.constant 0.000000e+00 : f32
    %255 = vector.broadcast %cst_78 : f32 to vector<16x32xf32>
    %256 = arith.maximumf %254, %255 : vector<16x32xf32>
    %c0_79 = arith.constant 0 : index
    %c0_80 = arith.constant 0 : index
    %257 = vector.load %arg6[%c0_79, %c0_80] : memref<32x32xbf16, #tpu.memory_space<vmem>>, vector<32x32xbf16>
    %c0_81 = arith.constant 0 : index
    %c0_82 = arith.constant 0 : index
    %258 = vector.load %arg7[%c0_81, %c0_82] : memref<1x32xf32, #tpu.memory_space<vmem>>, vector<1x32xf32>
    %259 = arith.truncf %256 : vector<16x32xf32> to vector<16x32xbf16>
    %cst_83 = arith.constant dense<0.000000e+00> : vector<16x32xf32>
    %260 = tpu.matmul %259, %257, %cst_83 {dimension_numbers = #tpu.dot_dimension_numbers<[1], [0], [0], [1], [0, 0, 1, 1], [], []>} : vector<16x32xbf16>, vector<32x32xbf16>, vector<16x32xf32> -> vector<16x32xf32>
    %261 = vector.broadcast %258 : vector<1x32xf32> to vector<16x32xf32>
    %262 = arith.addf %260, %261 : vector<16x32xf32>
    %cst_84 = arith.constant 0.000000e+00 : f32
    %263 = vector.broadcast %cst_84 : f32 to vector<16x32xf32>
    %264 = arith.maximumf %262, %263 : vector<16x32xf32>
    %c0_85 = arith.constant 0 : index
    %c0_86 = arith.constant 0 : index
    %265 = vector.load %arg8[%c0_85, %c0_86] : memref<32x32xbf16, #tpu.memory_space<vmem>>, vector<32x32xbf16>
    %c0_87 = arith.constant 0 : index
    %c0_88 = arith.constant 0 : index
    %266 = vector.load %arg9[%c0_87, %c0_88] : memref<1x32xf32, #tpu.memory_space<vmem>>, vector<1x32xf32>
    %267 = arith.truncf %264 : vector<16x32xf32> to vector<16x32xbf16>
    %cst_89 = arith.constant dense<0.000000e+00> : vector<16x32xf32>
    %268 = tpu.matmul %267, %265, %cst_89 {dimension_numbers = #tpu.dot_dimension_numbers<[1], [0], [0], [1], [0, 0, 1, 1], [], []>} : vector<16x32xbf16>, vector<32x32xbf16>, vector<16x32xf32> -> vector<16x32xf32>
    %269 = vector.broadcast %266 : vector<1x32xf32> to vector<16x32xf32>
    %270 = arith.addf %268, %269 : vector<16x32xf32>
    %cst_90 = arith.constant 0.000000e+00 : f32
    %271 = vector.broadcast %cst_90 : f32 to vector<16x32xf32>
    %272 = arith.maximumf %270, %271 : vector<16x32xf32>
    %c0_91 = arith.constant 0 : index
    %c0_92 = arith.constant 0 : index
    %273 = vector.load %arg10[%c0_91, %c0_92] : memref<16x32xf32, #tpu.memory_space<vmem>>, vector<16x32xf32>
    tpu.vector_store %arg10[%c0_91, %c0_92], %272 {strides = array<i32>} : memref<16x32xf32, #tpu.memory_space<vmem>>, vector<16x32xf32>,
    return
  }
}

</mosaic_0001>

<llo_original>
// kernel: tpu_custom_call.1
$region0: #{tpu_custom_call.1}
  #allocation0 [shape = 'u32[]', space=smem, size = 0x4, offset = 0x4, fixed_abs, tag = 'smem constant byte address 0x4 - core index']
  #allocation1 [shape = 'u32[144,128]{1,0:T(1,128)}', space=vmem, size = 0x12000, scoped, tag = 'internal scratch']
  %s0 = inlined_call_operand.hbm [shape: f32[16,32], index: 0, kind: input, shape index: {}]
  %s1 = inlined_call_operand.hbm [shape: s8[16,16], index: 1, kind: input, shape index: {}]
  %s2 = inlined_call_operand.hbm [shape: bf16[32,128], index: 2, kind: input, shape index: {}]
  %s3 = inlined_call_operand.vmem [shape: f32[1,128], index: 3, kind: input, shape index: {}]
  %s4 = inlined_call_operand.hbm [shape: bf16[32,128], index: 4, kind: input, shape index: {}]
  %s5 = inlined_call_operand.vmem [shape: f32[1,128], index: 5, kind: input, shape index: {}]
  %s6 = inlined_call_operand.vmem [shape: bf16[32,32], index: 6, kind: input, shape index: {}]
  %s7 = inlined_call_operand.vmem [shape: f32[1,32], index: 7, kind: input, shape index: {}]
  %s8 = inlined_call_operand.hbm [shape: bf16[32,32], index: 8, kind: input, shape index: {}]
  %s9 = inlined_call_operand.vmem [shape: f32[1,32], index: 9, kind: input, shape index: {}]
  %s10 = inlined_call_operand.hbm [shape: f32[16,32], index: 10, kind: output, shape index: {}]
  %s11 = sld [smem:[#allocation0]]
  $region70: #{tpu_custom_call.1} parent=0
    _
  %s13 = ssub.s32 1, %s11
  %s14 = scalar_select 0, %s13, %s11
  $region1: #{tpu_custom_call.1} parent=0
    #allocation2 [shape = 'u8[8192]{0}', space=vmem, size = 0x2000, scoped, tag = 'input window, operand 0, single buffered']
    #allocation3 [shape = 's32[1]{0}', space=sflag, size = 0x4, scoped, tag = 'scoped memory for tpu_custom_call.1']
    #allocation4 [shape = 's32[1]{0}', space=sflag, size = 0x4, scoped, tag = 'scoped memory for tpu_custom_call.1']
    #allocation5 [shape = 'u8[2048]{0}', space=vmem, size = 0x800, scoped, tag = 'input window, operand 1, single buffered']
    #allocation6 [shape = 's32[1]{0}', space=sflag, size = 0x4, scoped, tag = 'scoped memory for tpu_custom_call.1']
    #allocation7 [shape = 'u8[8192]{0}', space=vmem, size = 0x2000, scoped, tag = 'input window, operand 2, single buffered']
    #allocation8 [shape = 'u8[8192]{0}', space=vmem, size = 0x2000, scoped, tag = 'input window, operand 4, single buffered']
    #allocation9 [shape = 's32[1]{0}', space=sflag, size = 0x4, scoped, tag = 'scoped memory for tpu_custom_call.1']
    #allocation10 [shape = 'u8[8192]{0}', space=vmem, size = 0x2000, scoped, tag = 'input window, operand 8, single buffered']
    #allocation11 [shape = 'u8[8192]{0}', space=vmem, size = 0x2000, scoped, tag = 'output window, operand 0, single buffered']
    %15 = vsyncpa [#allocation3], 0
    %16 = vsyncpa [#allocation6], 0
    %17 = vsyncpa [#allocation9], 0
    %18 = vsyncpa [#allocation4], 0
    // Predicated region
    $region2: #{tpu_custom_call.1} parent=1 // pred_check
      _
    $region3: #{tpu_custom_call.1} parent=1 // pred_check_branch
      %20 = sbr.rel (0) target = $region5
    $region4: #{tpu_custom_call.1} parent=1 // pred_region
      %s22 = ssub.s32 256, 256
      %23 = vsyncadd [#allocation3], %s22
      %s24 = sshll.u32 [#allocation2], 4
      %s25 = int_to_ptr.vmem [resolvable:$true] %s24
      %30 = dma.hbm_to_vmem [thread:$0]  %s0, 256, %s25, [#allocation3], 128, 128, 8
    $region5: #{tpu_custom_call.1} parent=1 // pred_fallthru
      _
    // Predicated region
    $region6: #{tpu_custom_call.1} parent=1 // pred_check
      _
    $region7: #{tpu_custom_call.1} parent=1 // pred_check_branch
      %32 = sbr.rel (0) target = $region9
    $region8: #{tpu_custom_call.1} parent=1 // pred_region
      %s34 = ssub.s32 64, 64
      %35 = vsyncadd [#allocation6], %s34
      %s36 = sshll.u32 [#allocation5], 4
      %s37 = int_to_ptr.vmem [resolvable:$true] %s36
      %42 = dma.hbm_to_vmem [thread:$0]  %s1, 64, %s37, [#allocation6], 32, 32, 2
    $region9: #{tpu_custom_call.1} parent=1 // pred_fallthru
      _
    // Predicated region
    $region10: #{tpu_custom_call.1} parent=1 // pred_check
      _
    $region11: #{tpu_custom_call.1} parent=1 // pred_check_branch
      %44 = sbr.rel (0) target = $region13
    $region12: #{tpu_custom_call.1} parent=1 // pred_region
      %s46 = ssub.s32 256, 256
      %47 = vsyncadd [#allocation6], %s46
      %s48 = sshll.u32 [#allocation7], 4
      %s49 = int_to_ptr.vmem [resolvable:$true] %s48
      %54 = dma.hbm_to_vmem [thread:$0]  %s2, 256, %s49, [#allocation6], 64, 64, 4
    $region13: #{tpu_custom_call.1} parent=1 // pred_fallthru
      _
    // Predicated region
    $region14: #{tpu_custom_call.1} parent=1 // pred_check
      _
    $region15: #{tpu_custom_call.1} parent=1 // pred_check_branch
      %56 = sbr.rel (0) target = $region17
    $region16: #{tpu_custom_call.1} parent=1 // pred_region
      _
    $region17: #{tpu_custom_call.1} parent=1 // pred_fallthru
      _
    // Predicated region
    $region18: #{tpu_custom_call.1} parent=1 // pred_check
      _
    $region19: #{tpu_custom_call.1} parent=1 // pred_check_branch
      %58 = sbr.rel (0) target = $region21
    $region20: #{tpu_custom_call.1} parent=1 // pred_region
      %s60 = ssub.s32 256, 256
      %61 = vsyncadd [#allocation9], %s60
      %s62 = sshll.u32 [#allocation8], 4
      %s63 = int_to_ptr.vmem [resolvable:$true] %s62
      %68 = dma.hbm_to_vmem [thread:$0]  %s4, 256, %s63, [#allocation9], 64, 64, 4
    $region21: #{tpu_custom_call.1} parent=1 // pred_fallthru
      _
    // Predicated region
    $region22: #{tpu_custom_call.1} parent=1 // pred_check
      _
    $region23: #{tpu_custom_call.1} parent=1 // pred_check_branch
      %70 = sbr.rel (0) target = $region25
    $region24: #{tpu_custom_call.1} parent=1 // pred_region
      _
    $region25: #{tpu_custom_call.1} parent=1 // pred_fallthru
      _
    // Predicated region
    $region26: #{tpu_custom_call.1} parent=1 // pred_check
      _
    $region27: #{tpu_custom_call.1} parent=1 // pred_check_branch
      %72 = sbr.rel (0) target = $region29
    $region28: #{tpu_custom_call.1} parent=1 // pred_region
      _
    $region29: #{tpu_custom_call.1} parent=1 // pred_fallthru
      _
    // Predicated region
    $region30: #{tpu_custom_call.1} parent=1 // pred_check
      _
    $region31: #{tpu_custom_call.1} parent=1 // pred_check_branch
      %74 = sbr.rel (0) target = $region33
    $region32: #{tpu_custom_call.1} parent=1 // pred_region
      _
    $region33: #{tpu_custom_call.1} parent=1 // pred_fallthru
      _
    // Predicated region
    $region34: #{tpu_custom_call.1} parent=1 // pred_check
      _
    $region35: #{tpu_custom_call.1} parent=1 // pred_check_branch
      %76 = sbr.rel (0) target = $region37
    $region36: #{tpu_custom_call.1} parent=1 // pred_region
      %s78 = ssub.s32 256, 256
      %79 = vsyncadd [#allocation9], %s78
      %s80 = sshll.u32 [#allocation10], 4
      %s81 = int_to_ptr.vmem [resolvable:$true] %s80
      %86 = dma.hbm_to_vmem [thread:$0]  %s8, 256, %s81, [#allocation9], 64, 64, 4
    $region37: #{tpu_custom_call.1} parent=1 // pred_fallthru
      _
    // Predicated region
    $region38: #{tpu_custom_call.1} parent=1 // pred_check
      _
    $region39: #{tpu_custom_call.1} parent=1 // pred_check_branch
      %88 = sbr.rel (0) target = $region41
    $region40: #{tpu_custom_call.1} parent=1 // pred_region
      _
    $region41: #{tpu_custom_call.1} parent=1 // pred_fallthru
      _
    // Predicated region
    $region42: #{tpu_custom_call.1} parent=1 // pred_check
      _
    $region43: #{tpu_custom_call.1} parent=1 // pred_check_branch
      %90 = sbr.rel (0) target = $region45
    $region44: #{tpu_custom_call.1} parent=1 // pred_region
      %91 = dma.done [#allocation3], 256
    $region45: #{tpu_custom_call.1} parent=1 // pred_fallthru
      _
    // Predicated region
    $region46: #{tpu_custom_call.1} parent=1 // pred_check
      _
    $region47: #{tpu_custom_call.1} parent=1 // pred_check_branch
      %93 = sbr.rel (0) target = $region49
    $region48: #{tpu_custom_call.1} parent=1 // pred_region
      %94 = dma.done [#allocation6], 64
    $region49: #{tpu_custom_call.1} parent=1 // pred_fallthru
      _
    // Predicated region
    $region50: #{tpu_custom_call.1} parent=1 // pred_check
      _
    $region51: #{tpu_custom_call.1} parent=1 // pred_check_branch
      %96 = sbr.rel (0) target = $region53
    $region52: #{tpu_custom_call.1} parent=1 // pred_region
      %97 = dma.done [#allocation6], 256
    $region53: #{tpu_custom_call.1} parent=1 // pred_fallthru
      _
    // Predicated region
    $region54: #{tpu_custom_call.1} parent=1 // pred_check
      _
    $region55: #{tpu_custom_call.1} parent=1 // pred_check_branch
      %99 = sbr.rel (0) target = $region57
    $region56: #{tpu_custom_call.1} parent=1 // pred_region
      %100 = dma.done [#allocation9], 256
    $region57: #{tpu_custom_call.1} parent=1 // pred_fallthru
      _
    // Predicated region
    $region58: #{tpu_custom_call.1} parent=1 // pred_check
      _
    $region59: #{tpu_custom_call.1} parent=1 // pred_check_branch
      %102 = sbr.rel (0) target = $region61
    $region60: #{tpu_custom_call.1} parent=1 // pred_region
      %103 = dma.done [#allocation9], 256
    $region61: #{tpu_custom_call.1} parent=1 // pred_fallthru
      _
    %v105 = vld [vmem:[#allocation2] sm:$0xff]
    %v106 = vld [vmem:[#allocation2 + $0x8] sm:$0xff]
    %v107 = vld [vmem:[#allocation5] sm:$0x3]
    %v108 = vld [vmem:[#allocation5 + $0x2] sm:$0x3]
    %v109 = vunpack.c.0.s8 %v107
    %v110 = vunpack.c.0.s8 %v108
    %v111 = vcvt.s32.f32 %v109
    %v112 = vcvt.s32.f32 %v110
    %vm113 = vcmp.gt.f32.partialorder %v111, 0.0
    %vm114 = vcmp.gt.f32.partialorder %v112, 0.0
    %v115 = vld [vmem:[#allocation7] sm:$0xf]
    %v116 = vld [vmem:[#allocation7 + $0x4] sm:$0xf]
    %v117 = vld [vmem:[#allocation7 + $0x8] sm:$0xf]
    %v118 = vld [vmem:[#allocation7 + $0xc] sm:$0xf]
    %v119 = vld [vmem:[%s3] sm:$0x1]
    %v120 = vpack.c.bf16 %v106, %v105
    %v122 = vlaneseq
    %v123 = vshrl.u32 %v122, 7
    %v124 = vsub.s32 0, %v123
    %v125 = vrot.slane %v119, %v124
    %v131 = vunpack.c.l.b16 %v115
    %v132 = vunpack.c.l.b16 %v116
    %v133 = vunpack.c.l.b16 %v117
    %v134 = vunpack.c.l.b16 %v118
    %v135 = vpack.c.b16 %v132, %v131
    %v136 = vpack.c.b16 %v134, %v133
    %vm139 = vcmask 261120
    %v141 = vsel %vm139, %v120, 0
    %143 = vmatprep.subr.bf16.mxu0 0
    %144 = vmatpush1.bf16.msra.mxu0 %v135
    %145 = vmatprep.subr.bf16.mxu0 0
    %146 = vmatpush1.bf16.msra.mxu0 %v136
    %147 = vmatprep.subr.bf16.mxu0 0
    %148 = vmatpush1.bf16.msra.mxu0 0
    %149 = vmatprep.subr.bf16.mxu0 0
    %150 = vmatpush1.bf16.msra.mxu0 0
    %151 = vmatprep.subr.bf16.mxu0 0
    %152 = vmatpush1.bf16.msra.mxu0 0
    %153 = vmatprep.subr.bf16.mxu0 0
    %154 = vmatpush1.bf16.msra.mxu0 0
    %155 = vmatprep.subr.bf16.mxu0 0
    %156 = vmatpush1.bf16.msra.mxu0 0
    %157 = vmatprep.subr.bf16.mxu0 0
    %158 = vmatpush1.bf16.msra.mxu0 0
    %159 = vmatprep.subr.bf16.mxu0 0
    %160 = vmatpush1.bf16.msra.mxu0 0
    %161 = vmatprep.subr.bf16.mxu0 0
    %162 = vmatpush1.bf16.msra.mxu0 0
    %163 = vmatprep.subr.bf16.mxu0 0
    %164 = vmatpush1.bf16.msra.mxu0 0
    %165 = vmatprep.subr.bf16.mxu0 0
    %166 = vmatpush1.bf16.msra.mxu0 0
    %167 = vmatprep.subr.bf16.mxu0 0
    %168 = vmatpush1.bf16.msra.mxu0 0
    %169 = vmatprep.subr.bf16.mxu0 0
    %170 = vmatpush1.bf16.msra.mxu0 0
    %171 = vmatprep.subr.bf16.mxu0 0
    %172 = vmatpush1.bf16.msra.mxu0 0
    %173 = vmatprep.subr.bf16.mxu0 0
    %174 = vmatpush1.bf16.msra.mxu0 0
    %175 = vmatprep.mubr.bf16.mxu0 0
    %176 = vmatmul.mubr.bf16.gmra.mrb[0].mxu0 %v141
    %v177 = vpop.f32.mrb[0].mxu0
    %v178 = vadd.f32 %v125, %v177
    %v179 = vpop.f32.mrb[0].mxu0
    %v180 = vpop.f32.mrb[0].mxu0
    %v181 = vadd.f32 %v125, %v180
    %v182 = vpop.f32.mrb[0].mxu0
    %183 = vdwg.mxu0
    %v184 = vpack.c.bf16 %v181, %v178
    %186 = vrot.lane.b32.xlu0 %v184, 96
    %v187 = vpop.permute.xlu0 %186
    %vm188 = vcmask 64512
    %v190 = vsel %vm188, %v184, 0
    %v193 = vsel %vm188, %v187, 0
    %195 = vmatprep.subr.bf16.mxu0 0
    %196 = vmatpush1.bf16.xpose.msra.mxu0 %v193
    %197 = vmatprep.subr.bf16.mxu0 0
    %198 = vmatpush1.bf16.xpose.msra.mxu0 0
    %199 = vmatprep.subr.bf16.mxu0 0
    %200 = vmatpush1.bf16.xpose.msra.mxu0 0
    %201 = vmatprep.subr.bf16.mxu0 0
    %202 = vmatpush1.bf16.xpose.msra.mxu0 0
    %203 = vmatprep.subr.bf16.mxu0 0
    %204 = vmatpush1.bf16.xpose.msra.mxu0 0
    %205 = vmatprep.subr.bf16.mxu0 0
    %206 = vmatpush1.bf16.xpose.msra.mxu0 0
    %207 = vmatprep.subr.bf16.mxu0 0
    %208 = vmatpush1.bf16.xpose.msra.mxu0 0
    %209 = vmatprep.subr.bf16.mxu0 0
    %210 = vmatpush1.bf16.xpose.msra.mxu0 0
    %211 = vmatprep.subr.bf16.mxu0 0
    %212 = vmatpush1.bf16.xpose.msra.mxu0 0
    %213 = vmatprep.subr.bf16.mxu0 0
    %214 = vmatpush1.bf16.xpose.msra.mxu0 0
    %215 = vmatprep.subr.bf16.mxu0 0
    %216 = vmatpush1.bf16.xpose.msra.mxu0 0
    %217 = vmatprep.subr.bf16.mxu0 0
    %218 = vmatpush1.bf16.xpose.msra.mxu0 0
    %219 = vmatprep.subr.bf16.mxu0 0
    %220 = vmatpush1.bf16.xpose.msra.mxu0 0
    %221 = vmatprep.subr.bf16.mxu0 0
    %222 = vmatpush1.bf16.xpose.msra.mxu0 0
    %223 = vmatprep.subr.bf16.mxu0 0
    %224 = vmatpush1.bf16.xpose.msra.mxu0 0
    %225 = vmatprep.subr.bf16.mxu0 0
    %226 = vmatpush1.bf16.xpose.msra.mxu0 0
    %227 = vmatprep.mubr.bf16.mxu0 0
    %228 = vmatmul.mubr.bf16.gmra.mrb[0].mxu0 %v190
    %v229 = vpop.f32.mrb[0].mxu0
    %v230 = vadd.f32 0.0, %v229
    %v231 = vpop.f32.mrb[0].mxu0
    %v232 = vpop.f32.mrb[0].mxu0
    %v233 = vadd.f32 0.0, %v232
    %v234 = vpop.f32.mrb[0].mxu0
    %235 = vdwg.mxu0
    %v236 = vmul.f32 %v230, 0.35355338
    %v237 = vmul.f32 %v233, 0.35355338
    %v238 = vsel %vm113, %v236, -3.4028235e+38
    %v239 = vsel %vm114, %v237, -3.4028235e+38
    %vm240 = vcmask 130048
    %v241 = vsel %vm240, %v238, -inf
    %242 = vmax.xlane.f32.xlu0 %v241
    %v243 = vpop.xlane.xlu0 %242
    %v244 = vsel %vm240, %v239, -inf
    %245 = vmax.xlane.f32.xlu0 %v244
    %v246 = vpop.xlane.xlu0 %245
    %v247 = vsub.f32 %v238, %v243
    %v248 = vsub.f32 %v239, %v246
    %v249 = vmul.f32 %v247, 1.442695
    %v250 = vpow.pop %v249
    %v251 = vmul.f32 %v248, 1.442695
    %v252 = vpow.pop %v251
    %v253 = vmul.f32 %v250, %v111
    %v254 = vmul.f32 %v252, %v112
    %v255 = vsel %vm240, %v253, 0.0
    %256 = vadd.xlane.f32.xlu0 %v255
    %v257 = vpop.xlane.xlu0 %256
    %v258 = vsel %vm240, %v254, 0.0
    %259 = vadd.xlane.f32.xlu0 %v258
    %v260 = vpop.xlane.xlu0 %259
    %v261 = vpack.c.bf16 %v254, %v253
    %262 = vrot.lane.b32.xlu0 %v184, 64
    %v263 = vpop.permute.xlu0 %262
    %v266 = vsel %vm240, %v261, 0
    %268 = vmatprep.subr.bf16.mxu0 0
    %269 = vmatpush1.bf16.msra.mxu0 %v263
    %270 = vmatprep.subr.bf16.mxu0 0
    %271 = vmatpush1.bf16.msra.mxu0 0
    %272 = vmatprep.subr.bf16.mxu0 0
    %273 = vmatpush1.bf16.msra.mxu0 0
    %274 = vmatprep.subr.bf16.mxu0 0
    %275 = vmatpush1.bf16.msra.mxu0 0
    %276 = vmatprep.subr.bf16.mxu0 0
    %277 = vmatpush1.bf16.msra.mxu0 0
    %278 = vmatprep.subr.bf16.mxu0 0
    %279 = vmatpush1.bf16.msra.mxu0 0
    %280 = vmatprep.subr.bf16.mxu0 0
    %281 = vmatpush1.bf16.msra.mxu0 0
    %282 = vmatprep.subr.bf16.mxu0 0
    %283 = vmatpush1.bf16.msra.mxu0 0
    %284 = vmatprep.subr.bf16.mxu0 0
    %285 = vmatpush1.bf16.msra.mxu0 0
    %286 = vmatprep.subr.bf16.mxu0 0
    %287 = vmatpush1.bf16.msra.mxu0 0
    %288 = vmatprep.subr.bf16.mxu0 0
    %289 = vmatpush1.bf16.msra.mxu0 0
    %290 = vmatprep.subr.bf16.mxu0 0
    %291 = vmatpush1.bf16.msra.mxu0 0
    %292 = vmatprep.subr.bf16.mxu0 0
    %293 = vmatpush1.bf16.msra.mxu0 0
    %294 = vmatprep.subr.bf16.mxu0 0
    %295 = vmatpush1.bf16.msra.mxu0 0
    %296 = vmatprep.subr.bf16.mxu0 0
    %297 = vmatpush1.bf16.msra.mxu0 0
    %298 = vmatprep.subr.bf16.mxu0 0
    %299 = vmatpush1.bf16.msra.mxu0 0
    %300 = vmatprep.mubr.bf16.mxu0 0
    %301 = vmatmul.mubr.bf16.gmra.mrb[0].mxu0 %v266
    %v302 = vpop.f32.mrb[0].mxu0
    %v303 = vadd.f32 0.0, %v302
    %v304 = vpop.f32.mrb[0].mxu0
    %v305 = vpop.f32.mrb[0].mxu0
    %v306 = vadd.f32 0.0, %v305
    %v307 = vpop.f32.mrb[0].mxu0
    %308 = vdwg.mxu0
    %vm309 = vcmp.gt.f32.partialorder %v257, 0.0
    %vm310 = vcmp.gt.f32.partialorder %v260, 0.0
    %v311 = vsel %vm309, %v257, 1.0
    %v312 = vsel %vm310, %v260, 1.0
    %v313 = vrcp.pop %v311
    %v314 = vrcp.pop %v312
    %v315 = vmul.f32 %v303, %v313
    %v316 = vmul.f32 %v306, %v314
    %317 = vrot.lane.b32.xlu0 %v184, 120
    %v318 = vpop.permute.xlu0 %317
    %319 = vrot.lane.b32.xlu0 %v184, 88
    %v320 = vpop.permute.xlu0 %319
    %v322 = vsel %vm188, %v318, 0
    %v325 = vsel %vm188, %v320, 0
    %327 = vmatprep.subr.bf16.mxu0 0
    %328 = vmatpush1.bf16.xpose.msra.mxu0 %v325
    %329 = vmatprep.subr.bf16.mxu0 0
    %330 = vmatpush1.bf16.xpose.msra.mxu0 0
    %331 = vmatprep.subr.bf16.mxu0 0
    %332 = vmatpush1.bf16.xpose.msra.mxu0 0
    %333 = vmatprep.subr.bf16.mxu0 0
    %334 = vmatpush1.bf16.xpose.msra.mxu0 0
    %335 = vmatprep.subr.bf16.mxu0 0
    %336 = vmatpush1.bf16.xpose.msra.mxu0 0
    %337 = vmatprep.subr.bf16.mxu0 0
    %338 = vmatpush1.bf16.xpose.msra.mxu0 0
    %339 = vmatprep.subr.bf16.mxu0 0
    %340 = vmatpush1.bf16.xpose.msra.mxu0 0
    %341 = vmatprep.subr.bf16.mxu0 0
    %342 = vmatpush1.bf16.xpose.msra.mxu0 0
    %343 = vmatprep.subr.bf16.mxu0 0
    %344 = vmatpush1.bf16.xpose.msra.mxu0 0
    %345 = vmatprep.subr.bf16.mxu0 0
    %346 = vmatpush1.bf16.xpose.msra.mxu0 0
    %347 = vmatprep.subr.bf16.mxu0 0
    %348 = vmatpush1.bf16.xpose.msra.mxu0 0
    %349 = vmatprep.subr.bf16.mxu0 0
    %350 = vmatpush1.bf16.xpose.msra.mxu0 0
    %351 = vmatprep.subr.bf16.mxu0 0
    %352 = vmatpush1.bf16.xpose.msra.mxu0 0
    %353 = vmatprep.subr.bf16.mxu0 0
    %354 = vmatpush1.bf16.xpose.msra.mxu0 0
    %355 = vmatprep.subr.bf16.mxu0 0
    %356 = vmatpush1.bf16.xpose.msra.mxu0 0
    %357 = vmatprep.subr.bf16.mxu0 0
    %358 = vmatpush1.bf16.xpose.msra.mxu0 0
    %359 = vmatprep.mubr.bf16.mxu0 0
    %360 = vmatmul.mubr.bf16.gmra.mrb[0].mxu0 %v322
    %v361 = vpop.f32.mrb[0].mxu0
    %v362 = vadd.f32 0.0, %v361
    %v363 = vpop.f32.mrb[0].mxu0
    %v364 = vpop.f32.mrb[0].mxu0
    %v365 = vadd.f32 0.0, %v364
    %v366 = vpop.f32.mrb[0].mxu0
    %367 = vdwg.mxu0
    %v368 = vmul.f32 %v362, 0.35355338
    %v369 = vmul.f32 %v365, 0.35355338
    %v370 = vsel %vm113, %v368, -3.4028235e+38
    %v371 = vsel %vm114, %v369, -3.4028235e+38
    %v372 = vsel %vm240, %v370, -inf
    %373 = vmax.xlane.f32.xlu0 %v372
    %v374 = vpop.xlane.xlu0 %373
    %v375 = vsel %vm240, %v371, -inf
    %376 = vmax.xlane.f32.xlu0 %v375
    %v377 = vpop.xlane.xlu0 %376
    %v378 = vsub.f32 %v370, %v374
    %v379 = vsub.f32 %v371, %v377
    %v380 = vmul.f32 %v378, 1.442695
    %v381 = vpow.pop %v380
    %v382 = vmul.f32 %v379, 1.442695
    %v383 = vpow.pop %v382
    %v384 = vmul.f32 %v381, %v111
    %v385 = vmul.f32 %v383, %v112
    %v386 = vsel %vm240, %v384, 0.0
    %387 = vadd.xlane.f32.xlu0 %v386
    %v388 = vpop.xlane.xlu0 %387
    %v389 = vsel %vm240, %v385, 0.0
    %390 = vadd.xlane.f32.xlu0 %v389
    %v391 = vpop.xlane.xlu0 %390
    %v392 = vpack.c.bf16 %v385, %v384
    %393 = vrot.lane.b32.xlu0 %v184, 56
    %v394 = vpop.permute.xlu0 %393
    %v397 = vsel %vm240, %v392, 0
    %399 = vmatprep.subr.bf16.mxu0 0
    %400 = vmatpush1.bf16.msra.mxu0 %v394
    %401 = vmatprep.subr.bf16.mxu0 0
    %402 = vmatpush1.bf16.msra.mxu0 0
    %403 = vmatprep.subr.bf16.mxu0 0
    %404 = vmatpush1.bf16.msra.mxu0 0
    %405 = vmatprep.subr.bf16.mxu0 0
    %406 = vmatpush1.bf16.msra.mxu0 0
    %407 = vmatprep.subr.bf16.mxu0 0
    %408 = vmatpush1.bf16.msra.mxu0 0
    %409 = vmatprep.subr.bf16.mxu0 0
    %410 = vmatpush1.bf16.msra.mxu0 0
    %411 = vmatprep.subr.bf16.mxu0 0
    %412 = vmatpush1.bf16.msra.mxu0 0
    %413 = vmatprep.subr.bf16.mxu0 0
    %414 = vmatpush1.bf16.msra.mxu0 0
    %415 = vmatprep.subr.bf16.mxu0 0
    %416 = vmatpush1.bf16.msra.mxu0 0
    %417 = vmatprep.subr.bf16.mxu0 0
    %418 = vmatpush1.bf16.msra.mxu0 0
    %419 = vmatprep.subr.bf16.mxu0 0
    %420 = vmatpush1.bf16.msra.mxu0 0
    %421 = vmatprep.subr.bf16.mxu0 0
    %422 = vmatpush1.bf16.msra.mxu0 0
    %423 = vmatprep.subr.bf16.mxu0 0
    %424 = vmatpush1.bf16.msra.mxu0 0
    %425 = vmatprep.subr.bf16.mxu0 0
    %426 = vmatpush1.bf16.msra.mxu0 0
    %427 = vmatprep.subr.bf16.mxu0 0
    %428 = vmatpush1.bf16.msra.mxu0 0
    %429 = vmatprep.subr.bf16.mxu0 0
    %430 = vmatpush1.bf16.msra.mxu0 0
    %431 = vmatprep.mubr.bf16.mxu0 0
    %432 = vmatmul.mubr.bf16.gmra.mrb[0].mxu0 %v397
    %v433 = vpop.f32.mrb[0].mxu0
    %v434 = vadd.f32 0.0, %v433
    %v435 = vpop.f32.mrb[0].mxu0
    %v436 = vpop.f32.mrb[0].mxu0
    %v437 = vadd.f32 0.0, %v436
    %v438 = vpop.f32.mrb[0].mxu0
    %439 = vdwg.mxu0
    %vm440 = vcmp.gt.f32.partialorder %v388, 0.0
    %vm441 = vcmp.gt.f32.partialorder %v391, 0.0
    %v442 = vsel %vm440, %v388, 1.0
    %v443 = vsel %vm441, %v391, 1.0
    %v444 = vrcp.pop %v442
    %v445 = vrcp.pop %v443
    %v446 = vmul.f32 %v434, %v444
    %v447 = vmul.f32 %v437, %v445
    %448 = vrot.lane.b32.xlu0 %v184, 112
    %v449 = vpop.permute.xlu0 %448
    %450 = vrot.lane.b32.xlu0 %v184, 80
    %v451 = vpop.permute.xlu0 %450
    %v453 = vsel %vm188, %v449, 0
    %v456 = vsel %vm188, %v451, 0
    %458 = vmatprep.subr.bf16.mxu0 0
    %459 = vmatpush1.bf16.xpose.msra.mxu0 %v456
    %460 = vmatprep.subr.bf16.mxu0 0
    %461 = vmatpush1.bf16.xpose.msra.mxu0 0
    %462 = vmatprep.subr.bf16.mxu0 0
    %463 = vmatpush1.bf16.xpose.msra.mxu0 0
    %464 = vmatprep.subr.bf16.mxu0 0
    %465 = vmatpush1.bf16.xpose.msra.mxu0 0
    %466 = vmatprep.subr.bf16.mxu0 0
    %467 = vmatpush1.bf16.xpose.msra.mxu0 0
    %468 = vmatprep.subr.bf16.mxu0 0
    %469 = vmatpush1.bf16.xpose.msra.mxu0 0
    %470 = vmatprep.subr.bf16.mxu0 0
    %471 = vmatpush1.bf16.xpose.msra.mxu0 0
    %472 = vmatprep.subr.bf16.mxu0 0
    %473 = vmatpush1.bf16.xpose.msra.mxu0 0
    %474 = vmatprep.subr.bf16.mxu0 0
    %475 = vmatpush1.bf16.xpose.msra.mxu0 0
    %476 = vmatprep.subr.bf16.mxu0 0
    %477 = vmatpush1.bf16.xpose.msra.mxu0 0
    %478 = vmatprep.subr.bf16.mxu0 0
    %479 = vmatpush1.bf16.xpose.msra.mxu0 0
    %480 = vmatprep.subr.bf16.mxu0 0
    %481 = vmatpush1.bf16.xpose.msra.mxu0 0
    %482 = vmatprep.subr.bf16.mxu0 0
    %483 = vmatpush1.bf16.xpose.msra.mxu0 0
    %484 = vmatprep.subr.bf16.mxu0 0
    %485 = vmatpush1.bf16.xpose.msra.mxu0 0
    %486 = vmatprep.subr.bf16.mxu0 0
    %487 = vmatpush1.bf16.xpose.msra.mxu0 0
    %488 = vmatprep.subr.bf16.mxu0 0
    %489 = vmatpush1.bf16.xpose.msra.mxu0 0
    %490 = vmatprep.mubr.bf16.mxu0 0
    %491 = vmatmul.mubr.bf16.gmra.mrb[0].mxu0 %v453
    %v492 = vpop.f32.mrb[0].mxu0
    %v493 = vadd.f32 0.0, %v492
    %v494 = vpop.f32.mrb[0].mxu0
    %v495 = vpop.f32.mrb[0].mxu0
    %v496 = vadd.f32 0.0, %v495
    %v497 = vpop.f32.mrb[0].mxu0
    %498 = vdwg.mxu0
    %v499 = vmul.f32 %v493, 0.35355338
    %v500 = vmul.f32 %v496, 0.35355338
    %v501 = vsel %vm113, %v499, -3.4028235e+38
    %v502 = vsel %vm114, %v500, -3.4028235e+38
    %v503 = vsel %vm240, %v501, -inf
    %504 = vmax.xlane.f32.xlu0 %v503
    %v505 = vpop.xlane.xlu0 %504
    %v506 = vsel %vm240, %v502, -inf
    %507 = vmax.xlane.f32.xlu0 %v506
    %v508 = vpop.xlane.xlu0 %507
    %v509 = vsub.f32 %v501, %v505
    %v510 = vsub.f32 %v502, %v508
    %v511 = vmul.f32 %v509, 1.442695
    %v512 = vpow.pop %v511
    %v513 = vmul.f32 %v510, 1.442695
    %v514 = vpow.pop %v513
    %v515 = vmul.f32 %v512, %v111
    %v516 = vmul.f32 %v514, %v112
    %v517 = vsel %vm240, %v515, 0.0
    %518 = vadd.xlane.f32.xlu0 %v517
    %v519 = vpop.xlane.xlu0 %518
    %v520 = vsel %vm240, %v516, 0.0
    %521 = vadd.xlane.f32.xlu0 %v520
    %v522 = vpop.xlane.xlu0 %521
    %v523 = vpack.c.bf16 %v516, %v515
    %524 = vrot.lane.b32.xlu0 %v184, 48
    %v525 = vpop.permute.xlu0 %524
    %v528 = vsel %vm240, %v523, 0
    %530 = vmatprep.subr.bf16.mxu0 0
    %531 = vmatpush1.bf16.msra.mxu0 %v525
    %532 = vmatprep.subr.bf16.mxu0 0
    %533 = vmatpush1.bf16.msra.mxu0 0
    %534 = vmatprep.subr.bf16.mxu0 0
    %535 = vmatpush1.bf16.msra.mxu0 0
    %536 = vmatprep.subr.bf16.mxu0 0
    %537 = vmatpush1.bf16.msra.mxu0 0
    %538 = vmatprep.subr.bf16.mxu0 0
    %539 = vmatpush1.bf16.msra.mxu0 0
    %540 = vmatprep.subr.bf16.mxu0 0
    %541 = vmatpush1.bf16.msra.mxu0 0
    %542 = vmatprep.subr.bf16.mxu0 0
    %543 = vmatpush1.bf16.msra.mxu0 0
    %544 = vmatprep.subr.bf16.mxu0 0
    %545 = vmatpush1.bf16.msra.mxu0 0
    %546 = vmatprep.subr.bf16.mxu0 0
    %547 = vmatpush1.bf16.msra.mxu0 0
    %548 = vmatprep.subr.bf16.mxu0 0
    %549 = vmatpush1.bf16.msra.mxu0 0
    %550 = vmatprep.subr.bf16.mxu0 0
    %551 = vmatpush1.bf16.msra.mxu0 0
    %552 = vmatprep.subr.bf16.mxu0 0
    %553 = vmatpush1.bf16.msra.mxu0 0
    %554 = vmatprep.subr.bf16.mxu0 0
    %555 = vmatpush1.bf16.msra.mxu0 0
    %556 = vmatprep.subr.bf16.mxu0 0
    %557 = vmatpush1.bf16.msra.mxu0 0
    %558 = vmatprep.subr.bf16.mxu0 0
    %559 = vmatpush1.bf16.msra.mxu0 0
    %560 = vmatprep.subr.bf16.mxu0 0
    %561 = vmatpush1.bf16.msra.mxu0 0
    %562 = vmatprep.mubr.bf16.mxu0 0
    %563 = vmatmul.mubr.bf16.gmra.mrb[0].mxu0 %v528
    %v564 = vpop.f32.mrb[0].mxu0
    %v565 = vadd.f32 0.0, %v564
    %v566 = vpop.f32.mrb[0].mxu0
    %v567 = vpop.f32.mrb[0].mxu0
    %v568 = vadd.f32 0.0, %v567
    %v569 = vpop.f32.mrb[0].mxu0
    %570 = vdwg.mxu0
    %vm571 = vcmp.gt.f32.partialorder %v519, 0.0
    %vm572 = vcmp.gt.f32.partialorder %v522, 0.0
    %v573 = vsel %vm571, %v519, 1.0
    %v574 = vsel %vm572, %v522, 1.0
    %v575 = vrcp.pop %v573
    %v576 = vrcp.pop %v574
    %v577 = vmul.f32 %v565, %v575
    %v578 = vmul.f32 %v568, %v576
    %579 = vrot.lane.b32.xlu0 %v184, 104
    %v580 = vpop.permute.xlu0 %579
    %581 = vrot.lane.b32.xlu0 %v184, 72
    %v582 = vpop.permute.xlu0 %581
    %v584 = vsel %vm188, %v580, 0
    %v587 = vsel %vm188, %v582, 0
    %589 = vmatprep.subr.bf16.mxu0 0
    %590 = vmatpush1.bf16.xpose.msra.mxu0 %v587
    %591 = vmatprep.subr.bf16.mxu0 0
    %592 = vmatpush1.bf16.xpose.msra.mxu0 0
    %593 = vmatprep.subr.bf16.mxu0 0
    %594 = vmatpush1.bf16.xpose.msra.mxu0 0
    %595 = vmatprep.subr.bf16.mxu0 0
    %596 = vmatpush1.bf16.xpose.msra.mxu0 0
    %597 = vmatprep.subr.bf16.mxu0 0
    %598 = vmatpush1.bf16.xpose.msra.mxu0 0
    %599 = vmatprep.subr.bf16.mxu0 0
    %600 = vmatpush1.bf16.xpose.msra.mxu0 0
    %601 = vmatprep.subr.bf16.mxu0 0
    %602 = vmatpush1.bf16.xpose.msra.mxu0 0
    %603 = vmatprep.subr.bf16.mxu0 0
    %604 = vmatpush1.bf16.xpose.msra.mxu0 0
    %605 = vmatprep.subr.bf16.mxu0 0
    %606 = vmatpush1.bf16.xpose.msra.mxu0 0
    %607 = vmatprep.subr.bf16.mxu0 0
    %608 = vmatpush1.bf16.xpose.msra.mxu0 0
    %609 = vmatprep.subr.bf16.mxu0 0
    %610 = vmatpush1.bf16.xpose.msra.mxu0 0
    %611 = vmatprep.subr.bf16.mxu0 0
    %612 = vmatpush1.bf16.xpose.msra.mxu0 0
    %613 = vmatprep.subr.bf16.mxu0 0
    %614 = vmatpush1.bf16.xpose.msra.mxu0 0
    %615 = vmatprep.subr.bf16.mxu0 0
    %616 = vmatpush1.bf16.xpose.msra.mxu0 0
    %617 = vmatprep.subr.bf16.mxu0 0
    %618 = vmatpush1.bf16.xpose.msra.mxu0 0
    %619 = vmatprep.subr.bf16.mxu0 0
    %620 = vmatpush1.bf16.xpose.msra.mxu0 0
    %621 = vmatprep.mubr.bf16.mxu0 0
    %622 = vmatmul.mubr.bf16.gmra.mrb[0].mxu0 %v584
    %v623 = vpop.f32.mrb[0].mxu0
    %v624 = vadd.f32 0.0, %v623
    %v625 = vpop.f32.mrb[0].mxu0
    %v626 = vpop.f32.mrb[0].mxu0
    %v627 = vadd.f32 0.0, %v626
    %v628 = vpop.f32.mrb[0].mxu0
    %629 = vdwg.mxu0
    %v630 = vmul.f32 %v624, 0.35355338
    %v631 = vmul.f32 %v627, 0.35355338
    %v632 = vsel %vm113, %v630, -3.4028235e+38
    %v633 = vsel %vm114, %v631, -3.4028235e+38
    %v634 = vsel %vm240, %v632, -inf
    %635 = vmax.xlane.f32.xlu0 %v634
    %v636 = vpop.xlane.xlu0 %635
    %v637 = vsel %vm240, %v633, -inf
    %638 = vmax.xlane.f32.xlu0 %v637
    %v639 = vpop.xlane.xlu0 %638
    %v640 = vsub.f32 %v632, %v636
    %v641 = vsub.f32 %v633, %v639
    %v642 = vmul.f32 %v640, 1.442695
    %v643 = vpow.pop %v642
    %v644 = vmul.f32 %v641, 1.442695
    %v645 = vpow.pop %v644
    %v646 = vmul.f32 %v643, %v111
    %v647 = vmul.f32 %v645, %v112
    %v648 = vsel %vm240, %v646, 0.0
    %649 = vadd.xlane.f32.xlu0 %v648
    %v650 = vpop.xlane.xlu0 %649
    %v651 = vsel %vm240, %v647, 0.0
    %652 = vadd.xlane.f32.xlu0 %v651
    %v653 = vpop.xlane.xlu0 %652
    %v654 = vpack.c.bf16 %v647, %v646
    %655 = vrot.lane.b32.xlu0 %v184, 40
    %v656 = vpop.permute.xlu0 %655
    %v659 = vsel %vm240, %v654, 0
    %661 = vmatprep.subr.bf16.mxu0 0
    %662 = vmatpush1.bf16.msra.mxu0 %v656
    %663 = vmatprep.subr.bf16.mxu0 0
    %664 = vmatpush1.bf16.msra.mxu0 0
    %665 = vmatprep.subr.bf16.mxu0 0
    %666 = vmatpush1.bf16.msra.mxu0 0
    %667 = vmatprep.subr.bf16.mxu0 0
    %668 = vmatpush1.bf16.msra.mxu0 0
    %669 = vmatprep.subr.bf16.mxu0 0
    %670 = vmatpush1.bf16.msra.mxu0 0
    %671 = vmatprep.subr.bf16.mxu0 0
    %672 = vmatpush1.bf16.msra.mxu0 0
    %673 = vmatprep.subr.bf16.mxu0 0
    %674 = vmatpush1.bf16.msra.mxu0 0
    %675 = vmatprep.subr.bf16.mxu0 0
    %676 = vmatpush1.bf16.msra.mxu0 0
    %677 = vmatprep.subr.bf16.mxu0 0
    %678 = vmatpush1.bf16.msra.mxu0 0
    %679 = vmatprep.subr.bf16.mxu0 0
    %680 = vmatpush1.bf16.msra.mxu0 0
    %681 = vmatprep.subr.bf16.mxu0 0
    %682 = vmatpush1.bf16.msra.mxu0 0
    %683 = vmatprep.subr.bf16.mxu0 0
    %684 = vmatpush1.bf16.msra.mxu0 0
    %685 = vmatprep.subr.bf16.mxu0 0
    %686 = vmatpush1.bf16.msra.mxu0 0
    %687 = vmatprep.subr.bf16.mxu0 0
    %688 = vmatpush1.bf16.msra.mxu0 0
    %689 = vmatprep.subr.bf16.mxu0 0
    %690 = vmatpush1.bf16.msra.mxu0 0
    %691 = vmatprep.subr.bf16.mxu0 0
    %692 = vmatpush1.bf16.msra.mxu0 0
    %693 = vmatprep.mubr.bf16.mxu0 0
    %694 = vmatmul.mubr.bf16.gmra.mrb[0].mxu0 %v659
    %v695 = vpop.f32.mrb[0].mxu0
    %v696 = vadd.f32 0.0, %v695
    %v697 = vpop.f32.mrb[0].mxu0
    %v698 = vpop.f32.mrb[0].mxu0
    %v699 = vadd.f32 0.0, %v698
    %v700 = vpop.f32.mrb[0].mxu0
    %701 = vdwg.mxu0
    %vm702 = vcmp.gt.f32.partialorder %v650, 0.0
    %vm703 = vcmp.gt.f32.partialorder %v653, 0.0
    %v704 = vsel %vm702, %v650, 1.0
    %v705 = vsel %vm703, %v653, 1.0
    %v706 = vrcp.pop %v704
    %v707 = vrcp.pop %v705
    %v708 = vmul.f32 %v696, %v706
    %v709 = vmul.f32 %v699, %v707
    %712 = vrot.lane.b32.xlu0 %v446, 8
    %v713 = vpop.permute.xlu0 %712
    %714 = vrot.lane.b32.xlu0 %v447, 8
    %v715 = vpop.permute.xlu0 %714
    %720 = vrot.lane.b32.xlu0 %v577, 16
    %v721 = vpop.permute.xlu0 %720
    %722 = vrot.lane.b32.xlu0 %v578, 16
    %v723 = vpop.permute.xlu0 %722
    %728 = vrot.lane.b32.xlu0 %v708, 24
    %v729 = vpop.permute.xlu0 %728
    %730 = vrot.lane.b32.xlu0 %v709, 24
    %v731 = vpop.permute.xlu0 %730
    %v734 = vsel %vm188, %v315, %v713
    %v735 = vsel %vm188, %v316, %v715
    %v736 = vsel %vm240, %v734, %v721
    %v737 = vsel %vm240, %v735, %v723
    %vm738 = vcmask 195584
    %v739 = vsel %vm738, %v736, %v729
    %v740 = vsel %vm738, %v737, %v731
    %743 = vrot.lane.b32.xlu0 %v178, 32
    %v744 = vpop.permute.xlu0 %743
    %745 = vrot.lane.b32.xlu0 %v181, 32
    %v746 = vpop.permute.xlu0 %745
    %v749 = vadd.f32 %v739, %v744
    %v750 = vadd.f32 %v740, %v746
    %v751 = vmax.f32 %v749, 0.0
    %v752 = vmax.f32 %v750, 0.0
    %v753 = vld [vmem:[#allocation8] sm:$0xf]
    %v754 = vld [vmem:[#allocation8 + $0x4] sm:$0xf]
    %v755 = vld [vmem:[#allocation8 + $0x8] sm:$0xf]
    %v756 = vld [vmem:[#allocation8 + $0xc] sm:$0xf]
    %v757 = vld [vmem:[%s5] sm:$0x1]
    %v758 = vpack.c.bf16 %v752, %v751
    %v760 = vlaneseq
    %v761 = vshrl.u32 %v760, 7
    %v762 = vsub.s32 0, %v761
    %v763 = vrot.slane %v757, %v762
    %v769 = vunpack.c.l.b16 %v753
    %v770 = vunpack.c.l.b16 %v754
    %v771 = vunpack.c.l.b16 %v755
    %v772 = vunpack.c.l.b16 %v756
    %v773 = vpack.c.b16 %v770, %v769
    %v774 = vpack.c.b16 %v772, %v771
    %v778 = vsel %vm139, %v758, 0
    %780 = vmatprep.subr.bf16.mxu0 0
    %781 = vmatpush1.bf16.msra.mxu0 %v773
    %782 = vmatprep.subr.bf16.mxu0 0
    %783 = vmatpush1.bf16.msra.mxu0 %v774
    %784 = vmatprep.subr.bf16.mxu0 0
    %785 = vmatpush1.bf16.msra.mxu0 0
    %786 = vmatprep.subr.bf16.mxu0 0
    %787 = vmatpush1.bf16.msra.mxu0 0
    %788 = vmatprep.subr.bf16.mxu0 0
    %789 = vmatpush1.bf16.msra.mxu0 0
    %790 = vmatprep.subr.bf16.mxu0 0
    %791 = vmatpush1.bf16.msra.mxu0 0
    %792 = vmatprep.subr.bf16.mxu0 0
    %793 = vmatpush1.bf16.msra.mxu0 0
    %794 = vmatprep.subr.bf16.mxu0 0
    %795 = vmatpush1.bf16.msra.mxu0 0
    %796 = vmatprep.subr.bf16.mxu0 0
    %797 = vmatpush1.bf16.msra.mxu0 0
    %798 = vmatprep.subr.bf16.mxu0 0
    %799 = vmatpush1.bf16.msra.mxu0 0
    %800 = vmatprep.subr.bf16.mxu0 0
    %801 = vmatpush1.bf16.msra.mxu0 0
    %802 = vmatprep.subr.bf16.mxu0 0
    %803 = vmatpush1.bf16.msra.mxu0 0
    %804 = vmatprep.subr.bf16.mxu0 0
    %805 = vmatpush1.bf16.msra.mxu0 0
    %806 = vmatprep.subr.bf16.mxu0 0
    %807 = vmatpush1.bf16.msra.mxu0 0
    %808 = vmatprep.subr.bf16.mxu0 0
    %809 = vmatpush1.bf16.msra.mxu0 0
    %810 = vmatprep.subr.bf16.mxu0 0
    %811 = vmatpush1.bf16.msra.mxu0 0
    %812 = vmatprep.mubr.bf16.mxu0 0
    %813 = vmatmul.mubr.bf16.gmra.mrb[0].mxu0 %v778
    %v814 = vpop.f32.mrb[0].mxu0
    %v815 = vadd.f32 %v763, %v814
    %v816 = vpop.f32.mrb[0].mxu0
    %v817 = vpop.f32.mrb[0].mxu0
    %v818 = vadd.f32 %v763, %v817
    %v819 = vpop.f32.mrb[0].mxu0
    %820 = vdwg.mxu0
    %v821 = vpack.c.bf16 %v818, %v815
    %823 = vrot.lane.b32.xlu0 %v821, 96
    %v824 = vpop.permute.xlu0 %823
    %v826 = vsel %vm188, %v821, 0
    %v829 = vsel %vm188, %v824, 0
    %831 = vmatprep.subr.bf16.mxu0 0
    %832 = vmatpush1.bf16.xpose.msra.mxu0 %v829
    %833 = vmatprep.subr.bf16.mxu0 0
    %834 = vmatpush1.bf16.xpose.msra.mxu0 0
    %835 = vmatprep.subr.bf16.mxu0 0
    %836 = vmatpush1.bf16.xpose.msra.mxu0 0
    %837 = vmatprep.subr.bf16.mxu0 0
    %838 = vmatpush1.bf16.xpose.msra.mxu0 0
    %839 = vmatprep.subr.bf16.mxu0 0
    %840 = vmatpush1.bf16.xpose.msra.mxu0 0
    %841 = vmatprep.subr.bf16.mxu0 0
    %842 = vmatpush1.bf16.xpose.msra.mxu0 0
    %843 = vmatprep.subr.bf16.mxu0 0
    %844 = vmatpush1.bf16.xpose.msra.mxu0 0
    %845 = vmatprep.subr.bf16.mxu0 0
    %846 = vmatpush1.bf16.xpose.msra.mxu0 0
    %847 = vmatprep.subr.bf16.mxu0 0
    %848 = vmatpush1.bf16.xpose.msra.mxu0 0
    %849 = vmatprep.subr.bf16.mxu0 0
    %850 = vmatpush1.bf16.xpose.msra.mxu0 0
    %851 = vmatprep.subr.bf16.mxu0 0
    %852 = vmatpush1.bf16.xpose.msra.mxu0 0
    %853 = vmatprep.subr.bf16.mxu0 0
    %854 = vmatpush1.bf16.xpose.msra.mxu0 0
    %855 = vmatprep.subr.bf16.mxu0 0
    %856 = vmatpush1.bf16.xpose.msra.mxu0 0
    %857 = vmatprep.subr.bf16.mxu0 0
    %858 = vmatpush1.bf16.xpose.msra.mxu0 0
    %859 = vmatprep.subr.bf16.mxu0 0
    %860 = vmatpush1.bf16.xpose.msra.mxu0 0
    %861 = vmatprep.subr.bf16.mxu0 0
    %862 = vmatpush1.bf16.xpose.msra.mxu0 0
    %863 = vmatprep.mubr.bf16.mxu0 0
    %864 = vmatmul.mubr.bf16.gmra.mrb[0].mxu0 %v826
    %v865 = vpop.f32.mrb[0].mxu0
    %v866 = vadd.f32 0.0, %v865
    %v867 = vpop.f32.mrb[0].mxu0
    %v868 = vpop.f32.mrb[0].mxu0
    %v869 = vadd.f32 0.0, %v868
    %v870 = vpop.f32.mrb[0].mxu0
    %871 = vdwg.mxu0
    %v872 = vmul.f32 %v866, 0.35355338
    %v873 = vmul.f32 %v869, 0.35355338
    %v874 = vsel %vm113, %v872, -3.4028235e+38
    %v875 = vsel %vm114, %v873, -3.4028235e+38
    %v876 = vsel %vm240, %v874, -inf
    %877 = vmax.xlane.f32.xlu0 %v876
    %v878 = vpop.xlane.xlu0 %877
    %v879 = vsel %vm240, %v875, -inf
    %880 = vmax.xlane.f32.xlu0 %v879
    %v881 = vpop.xlane.xlu0 %880
    %v882 = vsub.f32 %v874, %v878
    %v883 = vsub.f32 %v875, %v881
    %v884 = vmul.f32 %v882, 1.442695
    %v885 = vpow.pop %v884
    %v886 = vmul.f32 %v883, 1.442695
    %v887 = vpow.pop %v886
    %v888 = vmul.f32 %v885, %v111
    %v889 = vmul.f32 %v887, %v112
    %v890 = vsel %vm240, %v888, 0.0
    %891 = vadd.xlane.f32.xlu0 %v890
    %v892 = vpop.xlane.xlu0 %891
    %v893 = vsel %vm240, %v889, 0.0
    %894 = vadd.xlane.f32.xlu0 %v893
    %v895 = vpop.xlane.xlu0 %894
    %v896 = vpack.c.bf16 %v889, %v888
    %897 = vrot.lane.b32.xlu0 %v821, 64
    %v898 = vpop.permute.xlu0 %897
    %v901 = vsel %vm240, %v896, 0
    %903 = vmatprep.subr.bf16.mxu0 0
    %904 = vmatpush1.bf16.msra.mxu0 %v898
    %905 = vmatprep.subr.bf16.mxu0 0
    %906 = vmatpush1.bf16.msra.mxu0 0
    %907 = vmatprep.subr.bf16.mxu0 0
    %908 = vmatpush1.bf16.msra.mxu0 0
    %909 = vmatprep.subr.bf16.mxu0 0
    %910 = vmatpush1.bf16.msra.mxu0 0
    %911 = vmatprep.subr.bf16.mxu0 0
    %912 = vmatpush1.bf16.msra.mxu0 0
    %913 = vmatprep.subr.bf16.mxu0 0
    %914 = vmatpush1.bf16.msra.mxu0 0
    %915 = vmatprep.subr.bf16.mxu0 0
    %916 = vmatpush1.bf16.msra.mxu0 0
    %917 = vmatprep.subr.bf16.mxu0 0
    %918 = vmatpush1.bf16.msra.mxu0 0
    %919 = vmatprep.subr.bf16.mxu0 0
    %920 = vmatpush1.bf16.msra.mxu0 0
    %921 = vmatprep.subr.bf16.mxu0 0
    %922 = vmatpush1.bf16.msra.mxu0 0
    %923 = vmatprep.subr.bf16.mxu0 0
    %924 = vmatpush1.bf16.msra.mxu0 0
    %925 = vmatprep.subr.bf16.mxu0 0
    %926 = vmatpush1.bf16.msra.mxu0 0
    %927 = vmatprep.subr.bf16.mxu0 0
    %928 = vmatpush1.bf16.msra.mxu0 0
    %929 = vmatprep.subr.bf16.mxu0 0
    %930 = vmatpush1.bf16.msra.mxu0 0
    %931 = vmatprep.subr.bf16.mxu0 0
    %932 = vmatpush1.bf16.msra.mxu0 0
    %933 = vmatprep.subr.bf16.mxu0 0
    %934 = vmatpush1.bf16.msra.mxu0 0
    %935 = vmatprep.mubr.bf16.mxu0 0
    %936 = vmatmul.mubr.bf16.gmra.mrb[0].mxu0 %v901
    %v937 = vpop.f32.mrb[0].mxu0
    %v938 = vadd.f32 0.0, %v937
    %v939 = vpop.f32.mrb[0].mxu0
    %v940 = vpop.f32.mrb[0].mxu0
    %v941 = vadd.f32 0.0, %v940
    %v942 = vpop.f32.mrb[0].mxu0
    %943 = vdwg.mxu0
    %vm944 = vcmp.gt.f32.partialorder %v892, 0.0
    %vm945 = vcmp.gt.f32.partialorder %v895, 0.0
    %v946 = vsel %vm944, %v892, 1.0
    %v947 = vsel %vm945, %v895, 1.0
    %v948 = vrcp.pop %v946
    %v949 = vrcp.pop %v947
    %v950 = vmul.f32 %v938, %v948
    %v951 = vmul.f32 %v941, %v949
    %952 = vrot.lane.b32.xlu0 %v821, 120
    %v953 = vpop.permute.xlu0 %952
    %954 = vrot.lane.b32.xlu0 %v821, 88
    %v955 = vpop.permute.xlu0 %954
    %v957 = vsel %vm188, %v953, 0
    %v960 = vsel %vm188, %v955, 0
    %962 = vmatprep.subr.bf16.mxu0 0
    %963 = vmatpush1.bf16.xpose.msra.mxu0 %v960
    %964 = vmatprep.subr.bf16.mxu0 0
    %965 = vmatpush1.bf16.xpose.msra.mxu0 0
    %966 = vmatprep.subr.bf16.mxu0 0
    %967 = vmatpush1.bf16.xpose.msra.mxu0 0
    %968 = vmatprep.subr.bf16.mxu0 0
    %969 = vmatpush1.bf16.xpose.msra.mxu0 0
    %970 = vmatprep.subr.bf16.mxu0 0
    %971 = vmatpush1.bf16.xpose.msra.mxu0 0
    %972 = vmatprep.subr.bf16.mxu0 0
    %973 = vmatpush1.bf16.xpose.msra.mxu0 0
    %974 = vmatprep.subr.bf16.mxu0 0
    %975 = vmatpush1.bf16.xpose.msra.mxu0 0
    %976 = vmatprep.subr.bf16.mxu0 0
    %977 = vmatpush1.bf16.xpose.msra.mxu0 0
    %978 = vmatprep.subr.bf16.mxu0 0
    %979 = vmatpush1.bf16.xpose.msra.mxu0 0
    %980 = vmatprep.subr.bf16.mxu0 0
    %981 = vmatpush1.bf16.xpose.msra.mxu0 0
    %982 = vmatprep.subr.bf16.mxu0 0
    %983 = vmatpush1.bf16.xpose.msra.mxu0 0
    %984 = vmatprep.subr.bf16.mxu0 0
    %985 = vmatpush1.bf16.xpose.msra.mxu0 0
    %986 = vmatprep.subr.bf16.mxu0 0
    %987 = vmatpush1.bf16.xpose.msra.mxu0 0
    %988 = vmatprep.subr.bf16.mxu0 0
    %989 = vmatpush1.bf16.xpose.msra.mxu0 0
    %990 = vmatprep.subr.bf16.mxu0 0
    %991 = vmatpush1.bf16.xpose.msra.mxu0 0
    %992 = vmatprep.subr.bf16.mxu0 0
    %993 = vmatpush1.bf16.xpose.msra.mxu0 0
    %994 = vmatprep.mubr.bf16.mxu0 0
    %995 = vmatmul.mubr.bf16.gmra.mrb[0].mxu0 %v957
    %v996 = vpop.f32.mrb[0].mxu0
    %v997 = vadd.f32 0.0, %v996
    %v998 = vpop.f32.mrb[0].mxu0
    %v999 = vpop.f32.mrb[0].mxu0
    %v1000 = vadd.f32 0.0, %v999
    %v1001 = vpop.f32.mrb[0].mxu0
    %1002 = vdwg.mxu0
    %v1003 = vmul.f32 %v997, 0.35355338
    %v1004 = vmul.f32 %v1000, 0.35355338
    %v1005 = vsel %vm113, %v1003, -3.4028235e+38
    %v1006 = vsel %vm114, %v1004, -3.4028235e+38
    %v1007 = vsel %vm240, %v1005, -inf
    %1008 = vmax.xlane.f32.xlu0 %v1007
    %v1009 = vpop.xlane.xlu0 %1008
    %v1010 = vsel %vm240, %v1006, -inf
    %1011 = vmax.xlane.f32.xlu0 %v1010
    %v1012 = vpop.xlane.xlu0 %1011
    %v1013 = vsub.f32 %v1005, %v1009
    %v1014 = vsub.f32 %v1006, %v1012
    %v1015 = vmul.f32 %v1013, 1.442695
    %v1016 = vpow.pop %v1015
    %v1017 = vmul.f32 %v1014, 1.442695
    %v1018 = vpow.pop %v1017
    %v1019 = vmul.f32 %v1016, %v111
    %v1020 = vmul.f32 %v1018, %v112
    %v1021 = vsel %vm240, %v1019, 0.0
    %1022 = vadd.xlane.f32.xlu0 %v1021
    %v1023 = vpop.xlane.xlu0 %1022
    %v1024 = vsel %vm240, %v1020, 0.0
    %1025 = vadd.xlane.f32.xlu0 %v1024
    %v1026 = vpop.xlane.xlu0 %1025
    %v1027 = vpack.c.bf16 %v1020, %v1019
    %1028 = vrot.lane.b32.xlu0 %v821, 56
    %v1029 = vpop.permute.xlu0 %1028
    %v1032 = vsel %vm240, %v1027, 0
    %1034 = vmatprep.subr.bf16.mxu0 0
    %1035 = vmatpush1.bf16.msra.mxu0 %v1029
    %1036 = vmatprep.subr.bf16.mxu0 0
    %1037 = vmatpush1.bf16.msra.mxu0 0
    %1038 = vmatprep.subr.bf16.mxu0 0
    %1039 = vmatpush1.bf16.msra.mxu0 0
    %1040 = vmatprep.subr.bf16.mxu0 0
    %1041 = vmatpush1.bf16.msra.mxu0 0
    %1042 = vmatprep.subr.bf16.mxu0 0
    %1043 = vmatpush1.bf16.msra.mxu0 0
    %1044 = vmatprep.subr.bf16.mxu0 0
    %1045 = vmatpush1.bf16.msra.mxu0 0
    %1046 = vmatprep.subr.bf16.mxu0 0
    %1047 = vmatpush1.bf16.msra.mxu0 0
    %1048 = vmatprep.subr.bf16.mxu0 0
    %1049 = vmatpush1.bf16.msra.mxu0 0
    %1050 = vmatprep.subr.bf16.mxu0 0
    %1051 = vmatpush1.bf16.msra.mxu0 0
    %1052 = vmatprep.subr.bf16.mxu0 0
    %1053 = vmatpush1.bf16.msra.mxu0 0
    %1054 = vmatprep.subr.bf16.mxu0 0
    %1055 = vmatpush1.bf16.msra.mxu0 0
    %1056 = vmatprep.subr.bf16.mxu0 0
    %1057 = vmatpush1.bf16.msra.mxu0 0
    %1058 = vmatprep.subr.bf16.mxu0 0
    %1059 = vmatpush1.bf16.msra.mxu0 0
    %1060 = vmatprep.subr.bf16.mxu0 0
    %1061 = vmatpush1.bf16.msra.mxu0 0
    %1062 = vmatprep.subr.bf16.mxu0 0
    %1063 = vmatpush1.bf16.msra.mxu0 0
    %1064 = vmatprep.subr.bf16.mxu0 0
    %1065 = vmatpush1.bf16.msra.mxu0 0
    %1066 = vmatprep.mubr.bf16.mxu0 0
    %1067 = vmatmul.mubr.bf16.gmra.mrb[0].mxu0 %v1032
    %v1068 = vpop.f32.mrb[0].mxu0
    %v1069 = vadd.f32 0.0, %v1068
    %v1070 = vpop.f32.mrb[0].mxu0
    %v1071 = vpop.f32.mrb[0].mxu0
    %v1072 = vadd.f32 0.0, %v1071
    %v1073 = vpop.f32.mrb[0].mxu0
    %1074 = vdwg.mxu0
    %vm1075 = vcmp.gt.f32.partialorder %v1023, 0.0
    %vm1076 = vcmp.gt.f32.partialorder %v1026, 0.0
    %v1077 = vsel %vm1075, %v1023, 1.0
    %v1078 = vsel %vm1076, %v1026, 1.0
    %v1079 = vrcp.pop %v1077
    %v1080 = vrcp.pop %v1078
    %v1081 = vmul.f32 %v1069, %v1079
    %v1082 = vmul.f32 %v1072, %v1080
    %1083 = vrot.lane.b32.xlu0 %v821, 112
    %v1084 = vpop.permute.xlu0 %1083
    %1085 = vrot.lane.b32.xlu0 %v821, 80
    %v1086 = vpop.permute.xlu0 %1085
    %v1088 = vsel %vm188, %v1084, 0
    %v1091 = vsel %vm188, %v1086, 0
    %1093 = vmatprep.subr.bf16.mxu0 0
    %1094 = vmatpush1.bf16.xpose.msra.mxu0 %v1091
    %1095 = vmatprep.subr.bf16.mxu0 0
    %1096 = vmatpush1.bf16.xpose.msra.mxu0 0
    %1097 = vmatprep.subr.bf16.mxu0 0
    %1098 = vmatpush1.bf16.xpose.msra.mxu0 0
    %1099 = vmatprep.subr.bf16.mxu0 0
    %1100 = vmatpush1.bf16.xpose.msra.mxu0 0
    %1101 = vmatprep.subr.bf16.mxu0 0
    %1102 = vmatpush1.bf16.xpose.msra.mxu0 0
    %1103 = vmatprep.subr.bf16.mxu0 0
    %1104 = vmatpush1.bf16.xpose.msra.mxu0 0
    %1105 = vmatprep.subr.bf16.mxu0 0
    %1106 = vmatpush1.bf16.xpose.msra.mxu0 0
    %1107 = vmatprep.subr.bf16.mxu0 0
    %1108 = vmatpush1.bf16.xpose.msra.mxu0 0
    %1109 = vmatprep.subr.bf16.mxu0 0
    %1110 = vmatpush1.bf16.xpose.msra.mxu0 0
    %1111 = vmatprep.subr.bf16.mxu0 0
    %1112 = vmatpush1.bf16.xpose.msra.mxu0 0
    %1113 = vmatprep.subr.bf16.mxu0 0
    %1114 = vmatpush1.bf16.xpose.msra.mxu0 0
    %1115 = vmatprep.subr.bf16.mxu0 0
    %1116 = vmatpush1.bf16.xpose.msra.mxu0 0
    %1117 = vmatprep.subr.bf16.mxu0 0
    %1118 = vmatpush1.bf16.xpose.msra.mxu0 0
    %1119 = vmatprep.subr.bf16.mxu0 0
    %1120 = vmatpush1.bf16.xpose.msra.mxu0 0
    %1121 = vmatprep.subr.bf16.mxu0 0
    %1122 = vmatpush1.bf16.xpose.msra.mxu0 0
    %1123 = vmatprep.subr.bf16.mxu0 0
    %1124 = vmatpush1.bf16.xpose.msra.mxu0 0
    %1125 = vmatprep.mubr.bf16.mxu0 0
    %1126 = vmatmul.mubr.bf16.gmra.mrb[0].mxu0 %v1088
    %v1127 = vpop.f32.mrb[0].mxu0
    %v1128 = vadd.f32 0.0, %v1127
    %v1129 = vpop.f32.mrb[0].mxu0
    %v1130 = vpop.f32.mrb[0].mxu0
    %v1131 = vadd.f32 0.0, %v1130
    %v1132 = vpop.f32.mrb[0].mxu0
    %1133 = vdwg.mxu0
    %v1134 = vmul.f32 %v1128, 0.35355338
    %v1135 = vmul.f32 %v1131, 0.35355338
    %v1136 = vsel %vm113, %v1134, -3.4028235e+38
    %v1137 = vsel %vm114, %v1135, -3.4028235e+38
    %v1138 = vsel %vm240, %v1136, -inf
    %1139 = vmax.xlane.f32.xlu0 %v1138
    %v1140 = vpop.xlane.xlu0 %1139
    %v1141 = vsel %vm240, %v1137, -inf
    %1142 = vmax.xlane.f32.xlu0 %v1141
    %v1143 = vpop.xlane.xlu0 %1142
    %v1144 = vsub.f32 %v1136, %v1140
    %v1145 = vsub.f32 %v1137, %v1143
    %v1146 = vmul.f32 %v1144, 1.442695
    %v1147 = vpow.pop %v1146
    %v1148 = vmul.f32 %v1145, 1.442695
    %v1149 = vpow.pop %v1148
    %v1150 = vmul.f32 %v1147, %v111
    %v1151 = vmul.f32 %v1149, %v112
    %v1152 = vsel %vm240, %v1150, 0.0
    %1153 = vadd.xlane.f32.xlu0 %v1152
    %v1154 = vpop.xlane.xlu0 %1153
    %v1155 = vsel %vm240, %v1151, 0.0
    %1156 = vadd.xlane.f32.xlu0 %v1155
    %v1157 = vpop.xlane.xlu0 %1156
    %v1158 = vpack.c.bf16 %v1151, %v1150
    %1159 = vrot.lane.b32.xlu0 %v821, 48
    %v1160 = vpop.permute.xlu0 %1159
    %v1163 = vsel %vm240, %v1158, 0
    %1165 = vmatprep.subr.bf16.mxu0 0
    %1166 = vmatpush1.bf16.msra.mxu0 %v1160
    %1167 = vmatprep.subr.bf16.mxu0 0
    %1168 = vmatpush1.bf16.msra.mxu0 0
    %1169 = vmatprep.subr.bf16.mxu0 0
    %1170 = vmatpush1.bf16.msra.mxu0 0
    %1171 = vmatprep.subr.bf16.mxu0 0
    %1172 = vmatpush1.bf16.msra.mxu0 0
    %1173 = vmatprep.subr.bf16.mxu0 0
    %1174 = vmatpush1.bf16.msra.mxu0 0
    %1175 = vmatprep.subr.bf16.mxu0 0
    %1176 = vmatpush1.bf16.msra.mxu0 0
    %1177 = vmatprep.subr.bf16.mxu0 0
    %1178 = vmatpush1.bf16.msra.mxu0 0
    %1179 = vmatprep.subr.bf16.mxu0 0
    %1180 = vmatpush1.bf16.msra.mxu0 0
    %1181 = vmatprep.subr.bf16.mxu0 0
    %1182 = vmatpush1.bf16.msra.mxu0 0
    %1183 = vmatprep.subr.bf16.mxu0 0
    %1184 = vmatpush1.bf16.msra.mxu0 0
    %1185 = vmatprep.subr.bf16.mxu0 0
    %1186 = vmatpush1.bf16.msra.mxu0 0
    %1187 = vmatprep.subr.bf16.mxu0 0
    %1188 = vmatpush1.bf16.msra.mxu0 0
    %1189 = vmatprep.subr.bf16.mxu0 0
    %1190 = vmatpush1.bf16.msra.mxu0 0
    %1191 = vmatprep.subr.bf16.mxu0 0
    %1192 = vmatpush1.bf16.msra.mxu0 0
    %1193 = vmatprep.subr.bf16.mxu0 0
    %1194 = vmatpush1.bf16.msra.mxu0 0
    %1195 = vmatprep.subr.bf16.mxu0 0
    %1196 = vmatpush1.bf16.msra.mxu0 0
    %1197 = vmatprep.mubr.bf16.mxu0 0
    %1198 = vmatmul.mubr.bf16.gmra.mrb[0].mxu0 %v1163
    %v1199 = vpop.f32.mrb[0].mxu0
    %v1200 = vadd.f32 0.0, %v1199
    %v1201 = vpop.f32.mrb[0].mxu0
    %v1202 = vpop.f32.mrb[0].mxu0
    %v1203 = vadd.f32 0.0, %v1202
    %v1204 = vpop.f32.mrb[0].mxu0
    %1205 = vdwg.mxu0
    %vm1206 = vcmp.gt.f32.partialorder %v1154, 0.0
    %vm1207 = vcmp.gt.f32.partialorder %v1157, 0.0
    %v1208 = vsel %vm1206, %v1154, 1.0
    %v1209 = vsel %vm1207, %v1157, 1.0
    %v1210 = vrcp.pop %v1208
    %v1211 = vrcp.pop %v1209
    %v1212 = vmul.f32 %v1200, %v1210
    %v1213 = vmul.f32 %v1203, %v1211
    %1214 = vrot.lane.b32.xlu0 %v821, 104
    %v1215 = vpop.permute.xlu0 %1214
    %1216 = vrot.lane.b32.xlu0 %v821, 72
    %v1217 = vpop.permute.xlu0 %1216
    %v1219 = vsel %vm188, %v1215, 0
    %v1222 = vsel %vm188, %v1217, 0
    %1224 = vmatprep.subr.bf16.mxu0 0
    %1225 = vmatpush1.bf16.xpose.msra.mxu0 %v1222
    %1226 = vmatprep.subr.bf16.mxu0 0
    %1227 = vmatpush1.bf16.xpose.msra.mxu0 0
    %1228 = vmatprep.subr.bf16.mxu0 0
    %1229 = vmatpush1.bf16.xpose.msra.mxu0 0
    %1230 = vmatprep.subr.bf16.mxu0 0
    %1231 = vmatpush1.bf16.xpose.msra.mxu0 0
    %1232 = vmatprep.subr.bf16.mxu0 0
    %1233 = vmatpush1.bf16.xpose.msra.mxu0 0
    %1234 = vmatprep.subr.bf16.mxu0 0
    %1235 = vmatpush1.bf16.xpose.msra.mxu0 0
    %1236 = vmatprep.subr.bf16.mxu0 0
    %1237 = vmatpush1.bf16.xpose.msra.mxu0 0
    %1238 = vmatprep.subr.bf16.mxu0 0
    %1239 = vmatpush1.bf16.xpose.msra.mxu0 0
    %1240 = vmatprep.subr.bf16.mxu0 0
    %1241 = vmatpush1.bf16.xpose.msra.mxu0 0
    %1242 = vmatprep.subr.bf16.mxu0 0
    %1243 = vmatpush1.bf16.xpose.msra.mxu0 0
    %1244 = vmatprep.subr.bf16.mxu0 0
    %1245 = vmatpush1.bf16.xpose.msra.mxu0 0
    %1246 = vmatprep.subr.bf16.mxu0 0
    %1247 = vmatpush1.bf16.xpose.msra.mxu0 0
    %1248 = vmatprep.subr.bf16.mxu0 0
    %1249 = vmatpush1.bf16.xpose.msra.mxu0 0
    %1250 = vmatprep.subr.bf16.mxu0 0
    %1251 = vmatpush1.bf16.xpose.msra.mxu0 0
    %1252 = vmatprep.subr.bf16.mxu0 0
    %1253 = vmatpush1.bf16.xpose.msra.mxu0 0
    %1254 = vmatprep.subr.bf16.mxu0 0
    %1255 = vmatpush1.bf16.xpose.msra.mxu0 0
    %1256 = vmatprep.mubr.bf16.mxu0 0
    %1257 = vmatmul.mubr.bf16.gmra.mrb[0].mxu0 %v1219
    %v1258 = vpop.f32.mrb[0].mxu0
    %v1259 = vadd.f32 0.0, %v1258
    %v1260 = vpop.f32.mrb[0].mxu0
    %v1261 = vpop.f32.mrb[0].mxu0
    %v1262 = vadd.f32 0.0, %v1261
    %v1263 = vpop.f32.mrb[0].mxu0
    %1264 = vdwg.mxu0
    %v1265 = vmul.f32 %v1259, 0.35355338
    %v1266 = vmul.f32 %v1262, 0.35355338
    %v1267 = vsel %vm113, %v1265, -3.4028235e+38
    %v1268 = vsel %vm114, %v1266, -3.4028235e+38
    %v1269 = vsel %vm240, %v1267, -inf
    %1270 = vmax.xlane.f32.xlu0 %v1269
    %v1271 = vpop.xlane.xlu0 %1270
    %v1272 = vsel %vm240, %v1268, -inf
    %1273 = vmax.xlane.f32.xlu0 %v1272
    %v1274 = vpop.xlane.xlu0 %1273
    %v1275 = vsub.f32 %v1267, %v1271
    %v1276 = vsub.f32 %v1268, %v1274
    %v1277 = vmul.f32 %v1275, 1.442695
    %v1278 = vpow.pop %v1277
    %v1279 = vmul.f32 %v1276, 1.442695
    %v1280 = vpow.pop %v1279
    %v1281 = vmul.f32 %v1278, %v111
    %v1282 = vmul.f32 %v1280, %v112
    %v1283 = vsel %vm240, %v1281, 0.0
    %1284 = vadd.xlane.f32.xlu0 %v1283
    %v1285 = vpop.xlane.xlu0 %1284
    %v1286 = vsel %vm240, %v1282, 0.0
    %1287 = vadd.xlane.f32.xlu0 %v1286
    %v1288 = vpop.xlane.xlu0 %1287
    %v1289 = vpack.c.bf16 %v1282, %v1281
    %1290 = vrot.lane.b32.xlu0 %v821, 40
    %v1291 = vpop.permute.xlu0 %1290
    %v1294 = vsel %vm240, %v1289, 0
    %1296 = vmatprep.subr.bf16.mxu0 0
    %1297 = vmatpush1.bf16.msra.mxu0 %v1291
    %1298 = vmatprep.subr.bf16.mxu0 0
    %1299 = vmatpush1.bf16.msra.mxu0 0
    %1300 = vmatprep.subr.bf16.mxu0 0
    %1301 = vmatpush1.bf16.msra.mxu0 0
    %1302 = vmatprep.subr.bf16.mxu0 0
    %1303 = vmatpush1.bf16.msra.mxu0 0
    %1304 = vmatprep.subr.bf16.mxu0 0
    %1305 = vmatpush1.bf16.msra.mxu0 0
    %1306 = vmatprep.subr.bf16.mxu0 0
    %1307 = vmatpush1.bf16.msra.mxu0 0
    %1308 = vmatprep.subr.bf16.mxu0 0
    %1309 = vmatpush1.bf16.msra.mxu0 0
    %1310 = vmatprep.subr.bf16.mxu0 0
    %1311 = vmatpush1.bf16.msra.mxu0 0
    %1312 = vmatprep.subr.bf16.mxu0 0
    %1313 = vmatpush1.bf16.msra.mxu0 0
    %1314 = vmatprep.subr.bf16.mxu0 0
    %1315 = vmatpush1.bf16.msra.mxu0 0
    %1316 = vmatprep.subr.bf16.mxu0 0
    %1317 = vmatpush1.bf16.msra.mxu0 0
    %1318 = vmatprep.subr.bf16.mxu0 0
    %1319 = vmatpush1.bf16.msra.mxu0 0
    %1320 = vmatprep.subr.bf16.mxu0 0
    %1321 = vmatpush1.bf16.msra.mxu0 0
    %1322 = vmatprep.subr.bf16.mxu0 0
    %1323 = vmatpush1.bf16.msra.mxu0 0
    %1324 = vmatprep.subr.bf16.mxu0 0
    %1325 = vmatpush1.bf16.msra.mxu0 0
    %1326 = vmatprep.subr.bf16.mxu0 0
    %1327 = vmatpush1.bf16.msra.mxu0 0
    %1328 = vmatprep.mubr.bf16.mxu0 0
    %1329 = vmatmul.mubr.bf16.gmra.mrb[0].mxu0 %v1294
    %v1330 = vpop.f32.mrb[0].mxu0
    %v1331 = vadd.f32 0.0, %v1330
    %v1332 = vpop.f32.mrb[0].mxu0
    %v1333 = vpop.f32.mrb[0].mxu0
    %v1334 = vadd.f32 0.0, %v1333
    %v1335 = vpop.f32.mrb[0].mxu0
    %1336 = vdwg.mxu0
    %vm1337 = vcmp.gt.f32.partialorder %v1285, 0.0
    %vm1338 = vcmp.gt.f32.partialorder %v1288, 0.0
    %v1339 = vsel %vm1337, %v1285, 1.0
    %v1340 = vsel %vm1338, %v1288, 1.0
    %v1341 = vrcp.pop %v1339
    %v1342 = vrcp.pop %v1340
    %v1343 = vmul.f32 %v1331, %v1341
    %v1344 = vmul.f32 %v1334, %v1342
    %1347 = vrot.lane.b32.xlu0 %v1081, 8
    %v1348 = vpop.permute.xlu0 %1347
    %1349 = vrot.lane.b32.xlu0 %v1082, 8
    %v1350 = vpop.permute.xlu0 %1349
    %1355 = vrot.lane.b32.xlu0 %v1212, 16
    %v1356 = vpop.permute.xlu0 %1355
    %1357 = vrot.lane.b32.xlu0 %v1213, 16
    %v1358 = vpop.permute.xlu0 %1357
    %1363 = vrot.lane.b32.xlu0 %v1343, 24
    %v1364 = vpop.permute.xlu0 %1363
    %1365 = vrot.lane.b32.xlu0 %v1344, 24
    %v1366 = vpop.permute.xlu0 %1365
    %v1369 = vsel %vm188, %v950, %v1348
    %v1370 = vsel %vm188, %v951, %v1350
    %v1371 = vsel %vm240, %v1369, %v1356
    %v1372 = vsel %vm240, %v1370, %v1358
    %v1373 = vsel %vm738, %v1371, %v1364
    %v1374 = vsel %vm738, %v1372, %v1366
    %1377 = vrot.lane.b32.xlu0 %v815, 32
    %v1378 = vpop.permute.xlu0 %1377
    %1379 = vrot.lane.b32.xlu0 %v818, 32
    %v1380 = vpop.permute.xlu0 %1379
    %v1383 = vadd.f32 %v1373, %v1378
    %v1384 = vadd.f32 %v1374, %v1380
    %v1385 = vmax.f32 %v1383, 0.0
    %v1386 = vmax.f32 %v1384, 0.0
    %v1387 = vld [vmem:[%s6] sm:$0xf]
    %v1388 = vld [vmem:[%s6 + $0x4] sm:$0xf]
    %v1389 = vld [vmem:[%s6 + $0x8] sm:$0xf]
    %v1390 = vld [vmem:[%s6 + $0xc] sm:$0xf]
    %v1391 = vld [vmem:[%s7] sm:$0x1]
    %v1392 = vpack.c.bf16 %v1386, %v1385
    %v1394 = vlaneseq
    %v1395 = vshrl.u32 %v1394, 7
    %v1396 = vsub.s32 0, %v1395
    %v1397 = vrot.slane %v1391, %v1396
    %v1403 = vunpack.c.l.b16 %v1387
    %v1404 = vunpack.c.l.b16 %v1388
    %v1405 = vunpack.c.l.b16 %v1389
    %v1406 = vunpack.c.l.b16 %v1390
    %v1407 = vpack.c.b16 %v1404, %v1403
    %v1408 = vpack.c.b16 %v1406, %v1405
    %v1412 = vsel %vm139, %v1392, 0
    %1414 = vmatprep.subr.bf16.mxu0 0
    %1415 = vmatpush1.bf16.msra.mxu0 %v1407
    %1416 = vmatprep.subr.bf16.mxu0 0
    %1417 = vmatpush1.bf16.msra.mxu0 %v1408
    %1418 = vmatprep.subr.bf16.mxu0 0
    %1419 = vmatpush1.bf16.msra.mxu0 0
    %1420 = vmatprep.subr.bf16.mxu0 0
    %1421 = vmatpush1.bf16.msra.mxu0 0
    %1422 = vmatprep.subr.bf16.mxu0 0
    %1423 = vmatpush1.bf16.msra.mxu0 0
    %1424 = vmatprep.subr.bf16.mxu0 0
    %1425 = vmatpush1.bf16.msra.mxu0 0
    %1426 = vmatprep.subr.bf16.mxu0 0
    %1427 = vmatpush1.bf16.msra.mxu0 0
    %1428 = vmatprep.subr.bf16.mxu0 0
    %1429 = vmatpush1.bf16.msra.mxu0 0
    %1430 = vmatprep.subr.bf16.mxu0 0
    %1431 = vmatpush1.bf16.msra.mxu0 0
    %1432 = vmatprep.subr.bf16.mxu0 0
    %1433 = vmatpush1.bf16.msra.mxu0 0
    %1434 = vmatprep.subr.bf16.mxu0 0
    %1435 = vmatpush1.bf16.msra.mxu0 0
    %1436 = vmatprep.subr.bf16.mxu0 0
    %1437 = vmatpush1.bf16.msra.mxu0 0
    %1438 = vmatprep.subr.bf16.mxu0 0
    %1439 = vmatpush1.bf16.msra.mxu0 0
    %1440 = vmatprep.subr.bf16.mxu0 0
    %1441 = vmatpush1.bf16.msra.mxu0 0
    %1442 = vmatprep.subr.bf16.mxu0 0
    %1443 = vmatpush1.bf16.msra.mxu0 0
    %1444 = vmatprep.subr.bf16.mxu0 0
    %1445 = vmatpush1.bf16.msra.mxu0 0
    %1446 = vmatprep.mubr.bf16.mxu0 0
    %1447 = vmatmul.mubr.bf16.gmra.mrb[0].mxu0 %v1412
    %v1448 = vpop.f32.mrb[0].mxu0
    %v1449 = vadd.f32 %v1397, %v1448
    %v1450 = vpop.f32.mrb[0].mxu0
    %v1451 = vpop.f32.mrb[0].mxu0
    %v1452 = vadd.f32 %v1397, %v1451
    %v1453 = vpop.f32.mrb[0].mxu0
    %1454 = vdwg.mxu0
    %v1455 = vmax.f32 %v1449, 0.0
    %v1456 = vmax.f32 %v1452, 0.0
    %v1457 = vld [vmem:[#allocation10] sm:$0xf]
    %v1458 = vld [vmem:[#allocation10 + $0x4] sm:$0xf]
    %v1459 = vld [vmem:[#allocation10 + $0x8] sm:$0xf]
    %v1460 = vld [vmem:[#allocation10 + $0xc] sm:$0xf]
    %v1461 = vld [vmem:[%s9] sm:$0x1]
    %v1462 = vpack.c.bf16 %v1456, %v1455
    %v1464 = vlaneseq
    %v1465 = vshrl.u32 %v1464, 7
    %v1466 = vsub.s32 0, %v1465
    %v1467 = vrot.slane %v1461, %v1466
    %v1473 = vunpack.c.l.b16 %v1457
    %v1474 = vunpack.c.l.b16 %v1458
    %v1475 = vunpack.c.l.b16 %v1459
    %v1476 = vunpack.c.l.b16 %v1460
    %v1477 = vpack.c.b16 %v1474, %v1473
    %v1478 = vpack.c.b16 %v1476, %v1475
    %v1482 = vsel %vm139, %v1462, 0
    %1484 = vmatprep.subr.bf16.mxu0 0
    %1485 = vmatpush1.bf16.msra.mxu0 %v1477
    %1486 = vmatprep.subr.bf16.mxu0 0
    %1487 = vmatpush1.bf16.msra.mxu0 %v1478
    %1488 = vmatprep.subr.bf16.mxu0 0
    %1489 = vmatpush1.bf16.msra.mxu0 0
    %1490 = vmatprep.subr.bf16.mxu0 0
    %1491 = vmatpush1.bf16.msra.mxu0 0
    %1492 = vmatprep.subr.bf16.mxu0 0
    %1493 = vmatpush1.bf16.msra.mxu0 0
    %1494 = vmatprep.subr.bf16.mxu0 0
    %1495 = vmatpush1.bf16.msra.mxu0 0
    %1496 = vmatprep.subr.bf16.mxu0 0
    %1497 = vmatpush1.bf16.msra.mxu0 0
    %1498 = vmatprep.subr.bf16.mxu0 0
    %1499 = vmatpush1.bf16.msra.mxu0 0
    %1500 = vmatprep.subr.bf16.mxu0 0
    %1501 = vmatpush1.bf16.msra.mxu0 0
    %1502 = vmatprep.subr.bf16.mxu0 0
    %1503 = vmatpush1.bf16.msra.mxu0 0
    %1504 = vmatprep.subr.bf16.mxu0 0
    %1505 = vmatpush1.bf16.msra.mxu0 0
    %1506 = vmatprep.subr.bf16.mxu0 0
    %1507 = vmatpush1.bf16.msra.mxu0 0
    %1508 = vmatprep.subr.bf16.mxu0 0
    %1509 = vmatpush1.bf16.msra.mxu0 0
    %1510 = vmatprep.subr.bf16.mxu0 0
    %1511 = vmatpush1.bf16.msra.mxu0 0
    %1512 = vmatprep.subr.bf16.mxu0 0
    %1513 = vmatpush1.bf16.msra.mxu0 0
    %1514 = vmatprep.subr.bf16.mxu0 0
    %1515 = vmatpush1.bf16.msra.mxu0 0
    %1516 = vmatprep.mubr.bf16.mxu0 0
    %1517 = vmatmul.mubr.bf16.gmra.mrb[0].mxu0 %v1482
    %v1518 = vpop.f32.mrb[0].mxu0
    %v1519 = vadd.f32 %v1467, %v1518
    %v1520 = vpop.f32.mrb[0].mxu0
    %v1521 = vpop.f32.mrb[0].mxu0
    %v1522 = vadd.f32 %v1467, %v1521
    %v1523 = vpop.f32.mrb[0].mxu0
    %1524 = vdwg.mxu0
    %v1525 = vmax.f32 %v1519, 0.0
    %v1526 = vmax.f32 %v1522, 0.0
    %1527 = vst.msk [vmem:[#allocation11] sm:$0xff] %vm139, %v1525
    %1528 = vst.msk [vmem:[#allocation11 + $0x8] sm:$0xff] %vm139, %v1526
    // Predicated region
    $region62: #{tpu_custom_call.1} parent=1 // pred_check
      _
    $region63: #{tpu_custom_call.1} parent=1 // pred_check_branch
      %1530 = sbr.rel (0) target = $region65
    $region64: #{tpu_custom_call.1} parent=1 // pred_region
      %s1532 = ssub.s32 256, 256
      %1533 = vsyncadd [#allocation4], %s1532
      %s1534 = sshll.u32 [#allocation11], 4
      %s1535 = int_to_ptr.vmem [resolvable:$true] %s1534
      %1540 = dma.vmem_to_hbm [thread:$0]  %s1535, 256, %s10, [#allocation4], 128, 128, 8
    $region65: #{tpu_custom_call.1} parent=1 // pred_fallthru
      _
    // Predicated region
    $region66: #{tpu_custom_call.1} parent=1 // pred_check
      _
    $region67: #{tpu_custom_call.1} parent=1 // pred_check_branch
      %1542 = sbr.rel (0) target = $region69
    $region68: #{tpu_custom_call.1} parent=1 // pred_region
      %1543 = dma.done [#allocation4], 256
    $region69: #{tpu_custom_call.1} parent=1 // pred_fallthru
      _
    %1544 = vsyncpa [#allocation3], 1
    %1545 = vsyncpa [#allocation6], 1
    %1546 = vsyncpa [#allocation9], 1
    %1547 = vsyncpa [#allocation4], 1

</llo_original>
